<compile_context>
chip_gen: v7x
topology: tpu7x:2x2x1
jax: 0.10.0
libtpu: 0.0.40
codegen_flags: <defaults>
</compile_context>

<pallas_src>
import functools

import jax
import jax.numpy as jnp
from jax.experimental import pallas as pl
from jax.experimental.pallas import tpu as pltpu


def context_kernel(x_ref, mem_ref, xm_ref, mm_ref,
                   wq_ref, wk_ref, wv_ref, bq_ref, bk_ref, bv_ref,
                   wo_ref, bo_ref, w1_ref, b1_ref, w2_ref, b2_ref,
                   out_ref, *, n_head, compute_dtype):
    f32 = jnp.float32
    cd = compute_dtype

    x = x_ref[0]        # (Lq, D)  float32
    mem = mem_ref[0]    # (Lk, D)  float32
    Lq, D = x.shape
    Lk = mem.shape[0]
    hd = D // n_head
    scale = 1.0 / float(hd) ** 0.5

    # Broadcast activations over the head (major) dim once; batched matmuls below.
    xb = jnp.broadcast_to(x.astype(cd)[None], (n_head, Lq, D))
    mb = jnp.broadcast_to(mem.astype(cd)[None], (n_head, Lk, D))

    # In-projections with pre-split per-head weights (no .T in kernel).
    q = jnp.einsum("hqd,hde->hqe", xb, wq_ref[...],
                   preferred_element_type=f32) + bq_ref[...]      # (H, Lq, hd)
    k = jnp.einsum("hkd,hde->hke", mb, wk_ref[...],
                   preferred_element_type=f32) + bk_ref[...]      # (H, Lk, hd)
    v = jnp.einsum("hkd,hde->hke", mb, wv_ref[...],
                   preferred_element_type=f32) + bv_ref[...]      # (H, Lk, hd)

    # Additive mask formed on the VPU from the per-head 1-D factors.
    mask = xm_ref[0][:, :, None] * mm_ref[0][:, None, :]          # (H, Lq, Lk)

    # Head-batched scaled dot-product attention (scores kept in f32).
    s = jnp.einsum("hqe,hke->hqk", q.astype(cd), k.astype(cd),
                   preferred_element_type=f32) * scale + mask     # (H, Lq, Lk)
    m = jnp.max(s, axis=-1, keepdims=True)
    p = jnp.exp(s - m)
    p = p * pl.reciprocal(jnp.sum(p, axis=-1, keepdims=True), approx=True)

    o = jnp.einsum("hqk,hke->hqe", p.astype(cd), v.astype(cd),
                   preferred_element_type=f32)                    # (H, Lq, hd)

    # Output projection: per-head (hd, D) slabs, summed over heads (== concat @ Wo^T).
    attn_h = jnp.einsum("hqe,hed->hqd", o.astype(cd), wo_ref[...],
                        preferred_element_type=f32)               # (H, Lq, D)
    attn = jnp.sum(attn_h, axis=0) + bo_ref[...]                  # (Lq, D)

    # Residual 1.
    h1 = x + attn

    # Position-wise feed-forward + residual 2 (weights pre-transposed in wrapper).
    ff = jnp.dot(h1.astype(cd), w1_ref[...], preferred_element_type=f32) + b1_ref[...]
    ff = jnp.maximum(ff, 0.0)
    ff = jnp.dot(ff.astype(cd), w2_ref[...], preferred_element_type=f32) + b2_ref[...]

    out_ref[0] = h1 + ff


def context_layer(x, mem, x_mask, mem_mask, params, n_head,
                  compute_dtype=jnp.float32):
    """Pallas implementation of ContextLayer.forward (batch-major layout).

    compute_dtype: dtype fed to the MXU (accumulation is always f32).  Use
    jnp.bfloat16 on v6e/v7x for ~3x faster matmuls (loosen tolerances).
    """
    B, Lq, D = x.shape
    Lk = mem.shape[1]
    dim_ff = params["w1"].shape[0]
    H = n_head
    hd = D // H
    f32 = jnp.float32

    # --- mask plumbing (never materialize (B, H, Lq, Lk)) ---------------------
    # Head (b, h) uses base[(b*H + h) % B]; gather only the 1-D factors.
    sel = (jnp.arange(B)[:, None] * H + jnp.arange(H)[None, :]) % B   # (B, H)
    xm_sel = x_mask[sel].astype(f32)     # (B, H, Lq)
    mm_sel = mem_mask[sel].astype(f32)   # (B, H, Lk)

    # --- one-time weight layout plumbing (no in-kernel transposes) ------------
    # q = x @ Wq^T  ->  per-head (D, hd) slabs with head leading.
    wq_h = params["wq"].reshape(H, hd, D).transpose(0, 2, 1).astype(compute_dtype)  # (H, D, hd)
    wk_h = params["wk"].reshape(H, hd, D).transpose(0, 2, 1).astype(compute_dtype)
    wv_h = params["wv"].reshape(H, hd, D).transpose(0, 2, 1).astype(compute_dtype)
    bq_h = params["bq"].reshape(H, 1, hd).astype(f32)
    bk_h = params["bk"].reshape(H, 1, hd).astype(f32)
    bv_h = params["bv"].reshape(H, 1, hd).astype(f32)
    # out = concat_h(o_h) @ Wo^T = sum_h o_h @ Wo[:, h*hd:(h+1)*hd]^T
    wo_h = params["wo"].reshape(D, H, hd).transpose(1, 2, 0).astype(compute_dtype)  # (H, hd, D)
    w1_t = params["w1"].T.astype(compute_dtype)   # (D, dim_ff)
    w2_t = params["w2"].T.astype(compute_dtype)   # (dim_ff, D)

    kernel = functools.partial(context_kernel, n_head=H, compute_dtype=compute_dtype)

    def full(shape):
        return pl.BlockSpec(shape, lambda b: (0,) * len(shape))

    grid_spec = pltpu.PrefetchScalarGridSpec(
        num_scalar_prefetch=0,
        grid=(B,),
        in_specs=[
            pl.BlockSpec((1, Lq, D), lambda b: (b, 0, 0)),    # x
            pl.BlockSpec((1, Lk, D), lambda b: (b, 0, 0)),    # mem
            pl.BlockSpec((1, H, Lq), lambda b: (b, 0, 0)),    # gathered x_mask rows
            pl.BlockSpec((1, H, Lk), lambda b: (b, 0, 0)),    # gathered mem_mask rows
            full((H, D, hd)), full((H, D, hd)), full((H, D, hd)),   # wq wk wv (per-head)
            full((H, 1, hd)), full((H, 1, hd)), full((H, 1, hd)),   # bq bk bv (per-head)
            full((H, hd, D)), full((1, D)),                         # wo (per-head), bo
            full((D, dim_ff)), full((1, dim_ff)),                   # w1^T, b1
            full((dim_ff, D)), full((1, D)),                        # w2^T, b2
        ],
        out_specs=pl.BlockSpec((1, Lq, D), lambda b: (b, 0, 0)),
    )

    return pl.pallas_call(
        kernel,
        out_shape=jax.ShapeDtypeStruct((B, Lq, D), f32),
        grid_spec=grid_spec,
        compiler_params=pltpu.CompilerParams(
            dimension_semantics=("parallel",)),       # v7x: shard batch over both TCs
    )(x, mem, xm_sel, mm_sel,
      wq_h, wk_h, wv_h, bq_h, bk_h, bv_h,
      wo_h, params["bo"].astype(f32),
      w1_t, params["b1"].astype(f32), w2_t, params["b2"].astype(f32))


def reference(x, mem, x_mask, mem_mask, params, n_head):
    """Pure-JAX reference reproducing the PyTorch forward (eval mode)."""
    B, Lq, D = x.shape
    hd = D // n_head
    scale = 1.0 / (hd ** 0.5)
    base = x_mask[:, :, None] * mem_mask[:, None, :]
    sel = (jnp.arange(B)[:, None] * n_head + jnp.arange(n_head)[None, :]) % B
    mask4d = base[sel]                                                        # (B, H, Lq, Lk)

    q = x @ params["wq"].T + params["bq"]
    k = mem @ params["wk"].T + params["bk"]
    v = mem @ params["wv"].T + params["bv"]
    q = q.reshape(B, Lq, n_head, hd).transpose(0, 2, 1, 3) * scale
    k = k.reshape(B, -1, n_head, hd).transpose(0, 2, 1, 3)
    v = v.reshape(B, -1, n_head, hd).transpose(0, 2, 1, 3)
    s = jnp.einsum("bhqd,bhkd->bhqk", q, k) + mask4d
    p = jax.nn.softmax(s, axis=-1)
    o = jnp.einsum("bhqk,bhkd->bhqd", p, v)
    o = o.transpose(0, 2, 1, 3).reshape(B, Lq, D)
    attn = o @ params["wo"].T + params["bo"]
    h1 = x + attn
    ff = jnp.maximum(h1 @ params["w1"].T + params["b1"], 0.0)
    ff = ff @ params["w2"].T + params["b2"]
    return h1 + ff


if __name__ == "__main__":
    B, Lq, Lk = 2, 8, 8
    D, dim_ff, n_head = 32, 64, 4

    key = jax.random.PRNGKey(0)
    ks = jax.random.split(key, 16)
    f32 = jnp.float32

    x = jax.random.normal(ks[0], (B, Lq, D), f32)
    mem = jax.random.normal(ks[1], (B, Lk, D), f32)
    x_mask = (jax.random.uniform(ks[2], (B, Lq)) > 0.3).astype(f32)
    mem_mask = (jax.random.uniform(ks[3], (B, Lk)) > 0.3).astype(f32)

    s = 0.02
    params = {
        "wq": jax.random.normal(ks[4], (D, D), f32) * s,
        "wk": jax.random.normal(ks[5], (D, D), f32) * s,
        "wv": jax.random.normal(ks[6], (D, D), f32) * s,
        "bq": jax.random.normal(ks[7], (1, D), f32) * s,
        "bk": jax.random.normal(ks[8], (1, D), f32) * s,
        "bv": jax.random.normal(ks[9], (1, D), f32) * s,
        "wo": jax.random.normal(ks[10], (D, D), f32) * s,
        "bo": jax.random.normal(ks[11], (1, D), f32) * s,
        "w1": jax.random.normal(ks[12], (dim_ff, D), f32) * s,
        "b1": jax.random.normal(ks[13], (1, dim_ff), f32) * s,
        "w2": jax.random.normal(ks[14], (D, dim_ff), f32) * s,
        "b2": jax.random.normal(ks[15], (1, D), f32) * s,
    }

    out = context_layer(x, mem, x_mask, mem_mask, params, n_head)
    out = jax.block_until_ready(out)

    ref = reference(x, mem, x_mask, mem_mask, params, n_head)
    assert out.shape == (B, Lq, D)
    # Tolerance slightly loosened for the approximate (EUP) softmax reciprocal;
    # end-to-end error stays well below 1e-3 on O(1) outputs.
    assert jnp.allclose(out, ref, atol=1e-3, rtol=1e-3), "mismatch vs reference"
    print("KERNEL_OK")
</pallas_src>

<mosaic_0001>
module attributes {stable_mosaic.version = 11 : i64} {
  func.func @context_kernel(%arg0: i32, %arg1: memref<1x8x32xf32, #tpu.memory_space<vmem>>, %arg2: memref<1x8x32xf32, #tpu.memory_space<vmem>>, %arg3: memref<1x4x8xf32, #tpu.memory_space<vmem>>, %arg4: memref<1x4x8xf32, #tpu.memory_space<vmem>>, %arg5: memref<4x32x8xf32, #tpu.memory_space<vmem>>, %arg6: memref<4x32x8xf32, #tpu.memory_space<vmem>>, %arg7: memref<4x32x8xf32, #tpu.memory_space<vmem>>, %arg8: memref<4x1x8xf32, #tpu.memory_space<vmem>>, %arg9: memref<4x1x8xf32, #tpu.memory_space<vmem>>, %arg10: memref<4x1x8xf32, #tpu.memory_space<vmem>>, %arg11: memref<4x8x32xf32, #tpu.memory_space<vmem>>, %arg12: memref<1x32xf32, #tpu.memory_space<vmem>>, %arg13: memref<32x64xf32, #tpu.memory_space<vmem>>, %arg14: memref<1x64xf32, #tpu.memory_space<vmem>>, %arg15: memref<64x32xf32, #tpu.memory_space<vmem>>, %arg16: memref<1x32xf32, #tpu.memory_space<vmem>>, %arg17: memref<1x8x32xf32, #tpu.memory_space<vmem>>) attributes {dimension_semantics = [#tpu.dimension_semantics<parallel>], iteration_bounds = array<i64: 2>, scalar_prefetch = 0 : i64, scratch_operands = 0 : i64, tpu.core_type = #tpu.core_type<tc>, window_params = [{transform_indices = @transform_0, window_bounds = array<i64: 1, 8, 32>}, {transform_indices = @transform_1, window_bounds = array<i64: 1, 8, 32>}, {transform_indices = @transform_2, window_bounds = array<i64: 1, 4, 8>}, {transform_indices = @transform_3, window_bounds = array<i64: 1, 4, 8>}, {pipeline_mode = #tpu.pipeline_mode<synchronous>, transform_indices = @transform_4, window_bounds = array<i64: 4, 32, 8>}, {pipeline_mode = #tpu.pipeline_mode<synchronous>, transform_indices = @transform_5, window_bounds = array<i64: 4, 32, 8>}, {pipeline_mode = #tpu.pipeline_mode<synchronous>, transform_indices = @transform_6, window_bounds = array<i64: 4, 32, 8>}, {pipeline_mode = #tpu.pipeline_mode<synchronous>, transform_indices = @transform_7, window_bounds = array<i64: 4, 1, 8>}, {pipeline_mode = #tpu.pipeline_mode<synchronous>, transform_indices = @transform_8, window_bounds = array<i64: 4, 1, 8>}, {pipeline_mode = #tpu.pipeline_mode<synchronous>, transform_indices = @transform_9, window_bounds = array<i64: 4, 1, 8>}, {pipeline_mode = #tpu.pipeline_mode<synchronous>, transform_indices = @transform_10, window_bounds = array<i64: 4, 8, 32>}, {pipeline_mode = #tpu.pipeline_mode<synchronous>, transform_indices = @transform_11, window_bounds = array<i64: 1, 32>}, {pipeline_mode = #tpu.pipeline_mode<synchronous>, transform_indices = @transform_12, window_bounds = array<i64: 32, 64>}, {pipeline_mode = #tpu.pipeline_mode<synchronous>, transform_indices = @transform_13, window_bounds = array<i64: 1, 64>}, {pipeline_mode = #tpu.pipeline_mode<synchronous>, transform_indices = @transform_14, window_bounds = array<i64: 64, 32>}, {pipeline_mode = #tpu.pipeline_mode<synchronous>, transform_indices = @transform_15, window_bounds = array<i64: 1, 32>}, {transform_indices = @transform_16, window_bounds = array<i64: 1, 8, 32>}]} {
    %c0 = arith.constant 0 : index
    %c0_0 = arith.constant 0 : index
    %c0_1 = arith.constant 0 : index
    %0 = vector.load %arg1[%c0, %c0_0, %c0_1] : memref<1x8x32xf32, #tpu.memory_space<vmem>>, vector<1x8x32xf32>
    %1 = vector.shape_cast %0 : vector<1x8x32xf32> to vector<8x32xf32>
    %c0_2 = arith.constant 0 : index
    %c0_3 = arith.constant 0 : index
    %c0_4 = arith.constant 0 : index
    %2 = vector.load %arg2[%c0_2, %c0_3, %c0_4] : memref<1x8x32xf32, #tpu.memory_space<vmem>>, vector<1x8x32xf32>
    %3 = vector.shape_cast %2 : vector<1x8x32xf32> to vector<8x32xf32>
    %4 = vector.shape_cast %1 : vector<8x32xf32> to vector<1x8x32xf32>
    %5 = vector.shape_cast %4 : vector<1x8x32xf32> to vector<1x8x32xf32>
    %6 = vector.broadcast %5 : vector<1x8x32xf32> to vector<4x8x32xf32>
    %7 = vector.shape_cast %3 : vector<8x32xf32> to vector<1x8x32xf32>
    %8 = vector.shape_cast %7 : vector<1x8x32xf32> to vector<1x8x32xf32>
    %9 = vector.broadcast %8 : vector<1x8x32xf32> to vector<4x8x32xf32>
    %c0_5 = arith.constant 0 : index
    %c0_6 = arith.constant 0 : index
    %c0_7 = arith.constant 0 : index
    %10 = vector.load %arg5[%c0_5, %c0_6, %c0_7] : memref<4x32x8xf32, #tpu.memory_space<vmem>>, vector<4x32x8xf32>
    "tpu.trace_start"() <{level = 10 : i32, message = "hqd,hde->hqe"}> : () -> ()
    %cst = arith.constant dense<0.000000e+00> : vector<4x8x8xf32>
    %11 = tpu.matmul %6, %10, %cst {dimension_numbers = #tpu.dot_dimension_numbers<[2], [1], [1], [2], [0, 0, 0, 1, 1, 2], [0], [0]>} : vector<4x8x32xf32>, vector<4x32x8xf32>, vector<4x8x8xf32> -> vector<4x8x8xf32>
    "tpu.trace_stop"() : () -> ()
    %c0_8 = arith.constant 0 : index
    %c0_9 = arith.constant 0 : index
    %c0_10 = arith.constant 0 : index
    %12 = vector.load %arg8[%c0_8, %c0_9, %c0_10] : memref<4x1x8xf32, #tpu.memory_space<vmem>>, vector<4x1x8xf32>
    %13 = vector.broadcast %12 : vector<4x1x8xf32> to vector<4x8x8xf32>
    %14 = arith.addf %11, %13 : vector<4x8x8xf32>
    %c0_11 = arith.constant 0 : index
    %c0_12 = arith.constant 0 : index
    %c0_13 = arith.constant 0 : index
    %15 = vector.load %arg6[%c0_11, %c0_12, %c0_13] : memref<4x32x8xf32, #tpu.memory_space<vmem>>, vector<4x32x8xf32>
    "tpu.trace_start"() <{level = 10 : i32, message = "hkd,hde->hke"}> : () -> ()
    %cst_14 = arith.constant dense<0.000000e+00> : vector<4x8x8xf32>
    %16 = tpu.matmul %9, %15, %cst_14 {dimension_numbers = #tpu.dot_dimension_numbers<[2], [1], [1], [2], [0, 0, 0, 1, 1, 2], [0], [0]>} : vector<4x8x32xf32>, vector<4x32x8xf32>, vector<4x8x8xf32> -> vector<4x8x8xf32>
    "tpu.trace_stop"() : () -> ()
    %c0_15 = arith.constant 0 : index
    %c0_16 = arith.constant 0 : index
    %c0_17 = arith.constant 0 : index
    %17 = vector.load %arg9[%c0_15, %c0_16, %c0_17] : memref<4x1x8xf32, #tpu.memory_space<vmem>>, vector<4x1x8xf32>
    %18 = vector.broadcast %17 : vector<4x1x8xf32> to vector<4x8x8xf32>
    %19 = arith.addf %16, %18 : vector<4x8x8xf32>
    %c0_18 = arith.constant 0 : index
    %c0_19 = arith.constant 0 : index
    %c0_20 = arith.constant 0 : index
    %20 = vector.load %arg7[%c0_18, %c0_19, %c0_20] : memref<4x32x8xf32, #tpu.memory_space<vmem>>, vector<4x32x8xf32>
    "tpu.trace_start"() <{level = 10 : i32, message = "hkd,hde->hke"}> : () -> ()
    %cst_21 = arith.constant dense<0.000000e+00> : vector<4x8x8xf32>
    %21 = tpu.matmul %9, %20, %cst_21 {dimension_numbers = #tpu.dot_dimension_numbers<[2], [1], [1], [2], [0, 0, 0, 1, 1, 2], [0], [0]>} : vector<4x8x32xf32>, vector<4x32x8xf32>, vector<4x8x8xf32> -> vector<4x8x8xf32>
    "tpu.trace_stop"() : () -> ()
    %c0_22 = arith.constant 0 : index
    %c0_23 = arith.constant 0 : index
    %c0_24 = arith.constant 0 : index
    %22 = vector.load %arg10[%c0_22, %c0_23, %c0_24] : memref<4x1x8xf32, #tpu.memory_space<vmem>>, vector<4x1x8xf32>
    %23 = vector.broadcast %22 : vector<4x1x8xf32> to vector<4x8x8xf32>
    %24 = arith.addf %21, %23 : vector<4x8x8xf32>
    %c0_25 = arith.constant 0 : index
    %c0_26 = arith.constant 0 : index
    %c0_27 = arith.constant 0 : index
    %25 = vector.load %arg3[%c0_25, %c0_26, %c0_27] : memref<1x4x8xf32, #tpu.memory_space<vmem>>, vector<1x4x8xf32>
    %26 = vector.shape_cast %25 : vector<1x4x8xf32> to vector<4x8xf32>
    %27 = vector.shape_cast %26 : vector<4x8xf32> to vector<4x8x1xf32>
    %c0_28 = arith.constant 0 : index
    %c0_29 = arith.constant 0 : index
    %c0_30 = arith.constant 0 : index
    %28 = vector.load %arg4[%c0_28, %c0_29, %c0_30] : memref<1x4x8xf32, #tpu.memory_space<vmem>>, vector<1x4x8xf32>
    %29 = vector.shape_cast %28 : vector<1x4x8xf32> to vector<4x8xf32>
    %30 = vector.shape_cast %29 : vector<4x8xf32> to vector<4x1x8xf32>
    %31 = vector.broadcast %27 : vector<4x8x1xf32> to vector<4x8x8xf32>
    %32 = vector.broadcast %30 : vector<4x1x8xf32> to vector<4x8x8xf32>
    %33 = arith.mulf %31, %32 : vector<4x8x8xf32>
    "tpu.trace_start"() <{level = 10 : i32, message = "hqe,hke->hqk"}> : () -> ()
    %cst_31 = arith.constant dense<0.000000e+00> : vector<4x8x8xf32>
    %34 = tpu.matmul %14, %19, %cst_31 {dimension_numbers = #tpu.dot_dimension_numbers<[2], [2], [1], [1], [0, 0, 0, 1, 1, 1], [0], [0]>} : vector<4x8x8xf32>, vector<4x8x8xf32>, vector<4x8x8xf32> -> vector<4x8x8xf32>
    "tpu.trace_stop"() : () -> ()
    %cst_32 = arith.constant 0.353553385 : f32
    %35 = vector.broadcast %cst_32 : f32 to vector<4x8x8xf32>
    %36 = arith.mulf %34, %35 : vector<4x8x8xf32>
    %37 = arith.addf %36, %33 : vector<4x8x8xf32>
    %cst_33 = arith.constant dense<0xFF800000> : vector<4x8xf32>
    %38 = vector.multi_reduction <maximumf>, %37, %cst_33 [2] : vector<4x8x8xf32> to vector<4x8xf32>
    %39 = vector.shape_cast %38 : vector<4x8xf32> to vector<4x8x1xf32>
    %40 = vector.broadcast %39 : vector<4x8x1xf32> to vector<4x8x8xf32>
    %41 = arith.subf %37, %40 : vector<4x8x8xf32>
    %42 = math.exp %41 : vector<4x8x8xf32>
    %cst_34 = arith.constant dense<0.000000e+00> : vector<4x8xf32>
    %43 = vector.multi_reduction <add>, %42, %cst_34 [2] : vector<4x8x8xf32> to vector<4x8xf32>
    %44 = vector.shape_cast %43 : vector<4x8xf32> to vector<4x8x1xf32>
    %45 = tpu.reciprocal %44 {approx = true} : vector<4x8x1xf32> -> vector<4x8x1xf32>
    %46 = vector.broadcast %45 : vector<4x8x1xf32> to vector<4x8x8xf32>
    %47 = arith.mulf %42, %46 : vector<4x8x8xf32>
    "tpu.trace_start"() <{level = 10 : i32, message = "hqk,hke->hqe"}> : () -> ()
    %cst_35 = arith.constant dense<0.000000e+00> : vector<4x8x8xf32>
    %48 = tpu.matmul %47, %24, %cst_35 {dimension_numbers = #tpu.dot_dimension_numbers<[2], [1], [1], [2], [0, 0, 0, 1, 1, 2], [0], [0]>} : vector<4x8x8xf32>, vector<4x8x8xf32>, vector<4x8x8xf32> -> vector<4x8x8xf32>
    "tpu.trace_stop"() : () -> ()
    %c0_36 = arith.constant 0 : index
    %c0_37 = arith.constant 0 : index
    %c0_38 = arith.constant 0 : index
    %49 = vector.load %arg11[%c0_36, %c0_37, %c0_38] : memref<4x8x32xf32, #tpu.memory_space<vmem>>, vector<4x8x32xf32>
    "tpu.trace_start"() <{level = 10 : i32, message = "hqe,hed->hqd"}> : () -> ()
    %cst_39 = arith.constant dense<0.000000e+00> : vector<4x8x32xf32>
    %50 = tpu.matmul %48, %49, %cst_39 {dimension_numbers = #tpu.dot_dimension_numbers<[2], [1], [1], [2], [0, 0, 0, 1, 1, 2], [0], [0]>} : vector<4x8x8xf32>, vector<4x8x32xf32>, vector<4x8x32xf32> -> vector<4x8x32xf32>
    "tpu.trace_stop"() : () -> ()
    %cst_40 = arith.constant dense<0.000000e+00> : vector<8x32xf32>
    %51 = vector.multi_reduction <add>, %50, %cst_40 [0] : vector<4x8x32xf32> to vector<8x32xf32>
    %c0_41 = arith.constant 0 : index
    %c0_42 = arith.constant 0 : index
    %52 = vector.load %arg12[%c0_41, %c0_42] : memref<1x32xf32, #tpu.memory_space<vmem>>, vector<1x32xf32>
    %53 = vector.broadcast %52 : vector<1x32xf32> to vector<8x32xf32>
    %54 = arith.addf %51, %53 : vector<8x32xf32>
    %55 = arith.addf %1, %54 : vector<8x32xf32>
    %c0_43 = arith.constant 0 : index
    %c0_44 = arith.constant 0 : index
    %56 = vector.load %arg13[%c0_43, %c0_44] : memref<32x64xf32, #tpu.memory_space<vmem>>, vector<32x64xf32>
    %cst_45 = arith.constant dense<0.000000e+00> : vector<8x64xf32>
    %57 = tpu.matmul %55, %56, %cst_45 {dimension_numbers = #tpu.dot_dimension_numbers<[1], [0], [0], [1], [0, 0, 1, 1], [], []>} : vector<8x32xf32>, vector<32x64xf32>, vector<8x64xf32> -> vector<8x64xf32>
    %c0_46 = arith.constant 0 : index
    %c0_47 = arith.constant 0 : index
    %58 = vector.load %arg14[%c0_46, %c0_47] : memref<1x64xf32, #tpu.memory_space<vmem>>, vector<1x64xf32>
    %59 = vector.broadcast %58 : vector<1x64xf32> to vector<8x64xf32>
    %60 = arith.addf %57, %59 : vector<8x64xf32>
    %cst_48 = arith.constant 0.000000e+00 : f32
    %61 = vector.broadcast %cst_48 : f32 to vector<8x64xf32>
    %62 = arith.maximumf %60, %61 : vector<8x64xf32>
    %c0_49 = arith.constant 0 : index
    %c0_50 = arith.constant 0 : index
    %63 = vector.load %arg15[%c0_49, %c0_50] : memref<64x32xf32, #tpu.memory_space<vmem>>, vector<64x32xf32>
    %cst_51 = arith.constant dense<0.000000e+00> : vector<8x32xf32>
    %64 = tpu.matmul %62, %63, %cst_51 {dimension_numbers = #tpu.dot_dimension_numbers<[1], [0], [0], [1], [0, 0, 1, 1], [], []>} : vector<8x64xf32>, vector<64x32xf32>, vector<8x32xf32> -> vector<8x32xf32>
    %c0_52 = arith.constant 0 : index
    %c0_53 = arith.constant 0 : index
    %65 = vector.load %arg16[%c0_52, %c0_53] : memref<1x32xf32, #tpu.memory_space<vmem>>, vector<1x32xf32>
    %66 = vector.broadcast %65 : vector<1x32xf32> to vector<8x32xf32>
    %67 = arith.addf %64, %66 : vector<8x32xf32>
    %68 = arith.addf %55, %67 : vector<8x32xf32>
    %c0_54 = arith.constant 0 : index
    %c0_55 = arith.constant 0 : index
    %c0_56 = arith.constant 0 : index
    %69 = vector.load %arg17[%c0_54, %c0_55, %c0_56] : memref<1x8x32xf32, #tpu.memory_space<vmem>>, vector<1x8x32xf32>
    %70 = vector.shape_cast %69 : vector<1x8x32xf32> to vector<8x32xf32>
    %71 = vector.shape_cast %68 : vector<8x32xf32> to vector<1x8x32xf32>
    tpu.vector_store %arg17[%c0_54, %c0_55, %c0_56], %71 {strides = array<i32>} : memref<1x8x32xf32, #tpu.memory_space<vmem>>, vector<1x8x32xf32>,
    return
  }
  func.func @transform_0(%arg0: i32) -> (i32, i32, i32) {
    %c0_i32 = arith.constant 0 : i32
    %c0_i32_0 = arith.constant 0 : i32
    %c0_i32_1 = arith.constant 0 : i32
    return %arg0, %c0_i32, %c0_i32_0 : i32, i32, i32
  }
  func.func @transform_1(%arg0: i32) -> (i32, i32, i32) {
    %c0_i32 = arith.constant 0 : i32
    %c0_i32_0 = arith.constant 0 : i32
    %c0_i32_1 = arith.constant 0 : i32
    return %arg0, %c0_i32, %c0_i32_0 : i32, i32, i32
  }
  func.func @transform_2(%arg0: i32) -> (i32, i32, i32) {
    %c0_i32 = arith.constant 0 : i32
    %c0_i32_0 = arith.constant 0 : i32
    %c0_i32_1 = arith.constant 0 : i32
    return %arg0, %c0_i32, %c0_i32_0 : i32, i32, i32
  }
  func.func @transform_3(%arg0: i32) -> (i32, i32, i32) {
    %c0_i32 = arith.constant 0 : i32
    %c0_i32_0 = arith.constant 0 : i32
    %c0_i32_1 = arith.constant 0 : i32
    return %arg0, %c0_i32, %c0_i32_0 : i32, i32, i32
  }
  func.func @transform_4(%arg0: i32) -> (i32, i32, i32) {
    %c0_i32 = arith.constant 0 : i32
    %c0_i32_0 = arith.constant 0 : i32
    %c0_i32_1 = arith.constant 0 : i32
    %c0_i32_2 = arith.constant 0 : i32
    return %c0_i32, %c0_i32_0, %c0_i32_1 : i32, i32, i32
  }
  func.func @transform_5(%arg0: i32) -> (i32, i32, i32) {
    %c0_i32 = arith.constant 0 : i32
    %c0_i32_0 = arith.constant 0 : i32
    %c0_i32_1 = arith.constant 0 : i32
    %c0_i32_2 = arith.constant 0 : i32
    return %c0_i32, %c0_i32_0, %c0_i32_1 : i32, i32, i32
  }
  func.func @transform_6(%arg0: i32) -> (i32, i32, i32) {
    %c0_i32 = arith.constant 0 : i32
    %c0_i32_0 = arith.constant 0 : i32
    %c0_i32_1 = arith.constant 0 : i32
    %c0_i32_2 = arith.constant 0 : i32
    return %c0_i32, %c0_i32_0, %c0_i32_1 : i32, i32, i32
  }
  func.func @transform_7(%arg0: i32) -> (i32, i32, i32) {
    %c0_i32 = arith.constant 0 : i32
    %c0_i32_0 = arith.constant 0 : i32
    %c0_i32_1 = arith.constant 0 : i32
    %c0_i32_2 = arith.constant 0 : i32
    return %c0_i32, %c0_i32_0, %c0_i32_1 : i32, i32, i32
  }
  func.func @transform_8(%arg0: i32) -> (i32, i32, i32) {
    %c0_i32 = arith.constant 0 : i32
    %c0_i32_0 = arith.constant 0 : i32
    %c0_i32_1 = arith.constant 0 : i32
    %c0_i32_2 = arith.constant 0 : i32
    return %c0_i32, %c0_i32_0, %c0_i32_1 : i32, i32, i32
  }
  func.func @transform_9(%arg0: i32) -> (i32, i32, i32) {
    %c0_i32 = arith.constant 0 : i32
    %c0_i32_0 = arith.constant 0 : i32
    %c0_i32_1 = arith.constant 0 : i32
    %c0_i32_2 = arith.constant 0 : i32
    return %c0_i32, %c0_i32_0, %c0_i32_1 : i32, i32, i32
  }
  func.func @transform_10(%arg0: i32) -> (i32, i32, i32) {
    %c0_i32 = arith.constant 0 : i32
    %c0_i32_0 = arith.constant 0 : i32
    %c0_i32_1 = arith.constant 0 : i32
    %c0_i32_2 = arith.constant 0 : i32
    return %c0_i32, %c0_i32_0, %c0_i32_1 : i32, i32, i32
  }
  func.func @transform_11(%arg0: i32) -> (i32, i32) {
    %c0_i32 = arith.constant 0 : i32
    %c0_i32_0 = arith.constant 0 : i32
    %c0_i32_1 = arith.constant 0 : i32
    return %c0_i32, %c0_i32_0 : i32, i32
  }
  func.func @transform_12(%arg0: i32) -> (i32, i32) {
    %c0_i32 = arith.constant 0 : i32
    %c0_i32_0 = arith.constant 0 : i32
    %c0_i32_1 = arith.constant 0 : i32
    return %c0_i32, %c0_i32_0 : i32, i32
  }
  func.func @transform_13(%arg0: i32) -> (i32, i32) {
    %c0_i32 = arith.constant 0 : i32
    %c0_i32_0 = arith.constant 0 : i32
    %c0_i32_1 = arith.constant 0 : i32
    return %c0_i32, %c0_i32_0 : i32, i32
  }
  func.func @transform_14(%arg0: i32) -> (i32, i32) {
    %c0_i32 = arith.constant 0 : i32
    %c0_i32_0 = arith.constant 0 : i32
    %c0_i32_1 = arith.constant 0 : i32
    return %c0_i32, %c0_i32_0 : i32, i32
  }
  func.func @transform_15(%arg0: i32) -> (i32, i32) {
    %c0_i32 = arith.constant 0 : i32
    %c0_i32_0 = arith.constant 0 : i32
    %c0_i32_1 = arith.constant 0 : i32
    return %c0_i32, %c0_i32_0 : i32, i32
  }
  func.func @transform_16(%arg0: i32) -> (i32, i32, i32) {
    %c0_i32 = arith.constant 0 : i32
    %c0_i32_0 = arith.constant 0 : i32
    %c0_i32_1 = arith.constant 0 : i32
    return %arg0, %c0_i32, %c0_i32_0 : i32, i32, i32
  }
}

</mosaic_0001>

<llo_original>
// kernel: tpu_custom_call.1
$region0: #{tpu_custom_call.1}
  #allocation0 [shape = 'u32[]', space=smem, size = 0x4, offset = 0x4, fixed_abs, tag = 'smem constant byte address 0x4 - core index']
  #allocation1 [shape = 'u32[144,128]{1,0:T(1,128)}', space=vmem, size = 0x12000, scoped, tag = 'internal scratch']
  %s0 = inlined_call_operand.vmem [shape: f32[2,8,32], index: 0, kind: input, shape index: {}]
  %s1 = inlined_call_operand.vmem [shape: f32[2,8,32], index: 1, kind: input, shape index: {}]
  %s2 = inlined_call_operand.vmem [shape: f32[2,4,8], index: 2, kind: input, shape index: {}]
  %s3 = inlined_call_operand.vmem [shape: f32[2,4,8], index: 3, kind: input, shape index: {}]
  %s4 = inlined_call_operand.vmem [shape: f32[4,32,8], index: 4, kind: input, shape index: {}]
  %s5 = inlined_call_operand.vmem [shape: f32[4,32,8], index: 5, kind: input, shape index: {}]
  %s6 = inlined_call_operand.vmem [shape: f32[4,32,8], index: 6, kind: input, shape index: {}]
  %s7 = inlined_call_operand.vmem [shape: f32[4,1,8], index: 7, kind: input, shape index: {}]
  %s8 = inlined_call_operand.vmem [shape: f32[4,1,8], index: 8, kind: input, shape index: {}]
  %s9 = inlined_call_operand.vmem [shape: f32[4,1,8], index: 9, kind: input, shape index: {}]
  %s10 = inlined_call_operand.vmem [shape: f32[4,8,32], index: 10, kind: input, shape index: {}]
  %s11 = inlined_call_operand.vmem [shape: f32[1,32], index: 11, kind: input, shape index: {}]
  %s12 = inlined_call_operand.vmem [shape: f32[32,64], index: 12, kind: input, shape index: {}]
  %s13 = inlined_call_operand.vmem [shape: f32[1,64], index: 13, kind: input, shape index: {}]
  %s14 = inlined_call_operand.vmem [shape: f32[64,32], index: 14, kind: input, shape index: {}]
  %s15 = inlined_call_operand.vmem [shape: f32[1,32], index: 15, kind: input, shape index: {}]
  %s16 = inlined_call_operand.hbm [shape: f32[2,8,32], index: 16, kind: output, shape index: {}]
  %s17 = sld [smem:[#allocation0]]
  $region97: #{tpu_custom_call.1} parent=0
    _
  %s19 = ssub.s32 1, %s17
  %s20 = scalar_select 0, %s19, %s17
  $region1: #{tpu_custom_call.1} parent=0
    #allocation2 [shape = 'u8[8192]{0}', space=vmem, size = 0x2000, scoped, tag = 'output window, operand 0']
    #allocation3 [shape = 's32[2]{0}', space=sflag, size = 0x8, scoped, tag = 'scoped memory for tpu_custom_call.1']
    %21 = vsyncpa [#allocation3], 0
    %s22 = scalar_lea.sflag [#allocation3], 1
    %23 = vsyncpa %s22, 0
    loop: start=0, step=1, limit=4
    $region2: #{tpu_custom_call.1} parent=1 // loop_pre_header
      _
    $region3: #{tpu_custom_call.1} parent=1 // loop_header
      %s25 = sphi 0, %s29
      %p26 = scmp.ge.s32.totalorder %s25, 4
      %s35 = sphi 0, %s37
      %s38 = sphi 0, %s35
      %s39 = sphi 0, %s38
      %s55 = sphi 0, %s39
      %s61 = sphi 0, %s63
      %s64 = sphi 0, %s61
      %s65 = sphi 0, %s64
      %s81 = sphi 0, %s65
      %s87 = sphi 0, %s89
      %s90 = sphi 0, %s87
      %s91 = sphi 0, %s90
      %s107 = sphi 0, %s91
      %s113 = sphi 0, %s115
      %s116 = sphi 0, %s113
      %s117 = sphi 0, %s116
      %s133 = sphi 0, %s117
      %s137 = sphi 0, %s137
      %s139 = sphi 0, %s137
      %s140 = sphi 0, %s139
      %s154 = sphi 0, %s140
      %s158 = sphi 0, %s158
      %s160 = sphi 0, %s158
      %s161 = sphi 0, %s160
      %s175 = sphi 0, %s161
      %s179 = sphi 0, %s179
      %s181 = sphi 0, %s179
      %s182 = sphi 0, %s181
      %s196 = sphi 0, %s182
      %s200 = sphi 0, %s200
      %s202 = sphi 0, %s200
      %s203 = sphi 0, %s202
      %s217 = sphi 0, %s203
      %s221 = sphi 0, %s221
      %s223 = sphi 0, %s221
      %s224 = sphi 0, %s223
      %s238 = sphi 0, %s224
      %s242 = sphi 0, %s242
      %s244 = sphi 0, %s242
      %s245 = sphi 0, %s244
      %s259 = sphi 0, %s245
      %s263 = sphi 0, %s263
      %s265 = sphi 0, %s263
      %s266 = sphi 0, %s265
      %s280 = sphi 0, %s266
      %s284 = sphi 0, %s284
      %s286 = sphi 0, %s284
      %s287 = sphi 0, %s286
      %s301 = sphi 0, %s287
      %s305 = sphi 0, %s305
      %s307 = sphi 0, %s305
      %s308 = sphi 0, %s307
      %s322 = sphi 0, %s308
      %s326 = sphi 0, %s326
      %s328 = sphi 0, %s326
      %s329 = sphi 0, %s328
      %s343 = sphi 0, %s329
      %s347 = sphi 0, %s347
      %s349 = sphi 0, %s347
      %s350 = sphi 0, %s349
      %s364 = sphi 0, %s350
      %s368 = sphi 0, %s368
      %s370 = sphi 0, %s368
      %s371 = sphi 0, %s370
      %s385 = sphi 0, %s371
      %s391 = sphi 0, %s393
      %s394 = sphi 0, %s391
      %s395 = sphi 0, %s394
      %s411 = sphi 0, %s395
    $region4: #{tpu_custom_call.1} parent=1 // loop_header_branch
      %28 = sbr.rel (%p26) target = $region8
    $region5: #{tpu_custom_call.1} parent=1 // loop_body
      %s30 = ssub.s32 %s25, 1
      %s31 = ssub.s32 %s25, 2
      %s32 = sadd.s32 %s25, 1
      %s33 = ssub.s32 %s25, %s32
      %p34 = scmp.eq.s32.totalorder %s33, 0
      %s36 = sadd.s32 %s35, 1
      %s37 = scalar_select %p34, %s35, %s36
      %p40 = pneg %p34
      %p41 = scmp.eq.s32.totalorder %s25, 1
      %p42 = por %p40, %p41
      %p43 = scmp.ne.s32.totalorder %s35, %s38
      %p44 = scmp.eq.s32.totalorder %s25, 0
      %p45 = por %p43, %p44
      %p46 = scmp.ne.s32.totalorder %s35, %s38
      %p47 = scmp.eq.s32.totalorder %s30, 1
      %p48 = por %p46, %p47
      %p49 = scmp.ne.s32.totalorder %s38, %s39
      %p50 = scmp.eq.s32.totalorder %s30, 0
      %p51 = por %p49, %p50
      %p52 = scmp.ne.s32.totalorder %s38, %s39
      %p53 = scmp.eq.s32.totalorder %s31, 1
      %p54 = por %p52, %p53
      %p56 = scmp.ne.s32.totalorder %s39, %s55
      %p57 = scmp.eq.s32.totalorder %s31, 0
      %p58 = por %p56, %p57
      %s59 = ssub.s32 %s25, %s32
      %p60 = scmp.eq.s32.totalorder %s59, 0
      %s62 = sadd.s32 %s61, 1
      %s63 = scalar_select %p60, %s61, %s62
      %p66 = pneg %p60
      %p67 = scmp.eq.s32.totalorder %s25, 1
      %p68 = por %p66, %p67
      %p69 = scmp.ne.s32.totalorder %s61, %s64
      %p70 = scmp.eq.s32.totalorder %s25, 0
      %p71 = por %p69, %p70
      %p72 = scmp.ne.s32.totalorder %s61, %s64
      %p73 = scmp.eq.s32.totalorder %s30, 1
      %p74 = por %p72, %p73
      %p75 = scmp.ne.s32.totalorder %s64, %s65
      %p76 = scmp.eq.s32.totalorder %s30, 0
      %p77 = por %p75, %p76
      %p78 = scmp.ne.s32.totalorder %s64, %s65
      %p79 = scmp.eq.s32.totalorder %s31, 1
      %p80 = por %p78, %p79
      %p82 = scmp.ne.s32.totalorder %s65, %s81
      %p83 = scmp.eq.s32.totalorder %s31, 0
      %p84 = por %p82, %p83
      %s85 = ssub.s32 %s25, %s32
      %p86 = scmp.eq.s32.totalorder %s85, 0
      %s88 = sadd.s32 %s87, 1
      %s89 = scalar_select %p86, %s87, %s88
      %p92 = pneg %p86
      %p93 = scmp.eq.s32.totalorder %s25, 1
      %p94 = por %p92, %p93
      %p95 = scmp.ne.s32.totalorder %s87, %s90
      %p96 = scmp.eq.s32.totalorder %s25, 0
      %p97 = por %p95, %p96
      %p98 = scmp.ne.s32.totalorder %s87, %s90
      %p99 = scmp.eq.s32.totalorder %s30, 1
      %p100 = por %p98, %p99
      %p101 = scmp.ne.s32.totalorder %s90, %s91
      %p102 = scmp.eq.s32.totalorder %s30, 0
      %p103 = por %p101, %p102
      %p104 = scmp.ne.s32.totalorder %s90, %s91
      %p105 = scmp.eq.s32.totalorder %s31, 1
      %p106 = por %p104, %p105
      %p108 = scmp.ne.s32.totalorder %s91, %s107
      %p109 = scmp.eq.s32.totalorder %s31, 0
      %p110 = por %p108, %p109
      %s111 = ssub.s32 %s25, %s32
      %p112 = scmp.eq.s32.totalorder %s111, 0
      %s114 = sadd.s32 %s113, 1
      %s115 = scalar_select %p112, %s113, %s114
      %p118 = pneg %p112
      %p119 = scmp.eq.s32.totalorder %s25, 1
      %p120 = por %p118, %p119
      %p121 = scmp.ne.s32.totalorder %s113, %s116
      %p122 = scmp.eq.s32.totalorder %s25, 0
      %p123 = por %p121, %p122
      %p124 = scmp.ne.s32.totalorder %s113, %s116
      %p125 = scmp.eq.s32.totalorder %s30, 1
      %p126 = por %p124, %p125
      %p127 = scmp.ne.s32.totalorder %s116, %s117
      %p128 = scmp.eq.s32.totalorder %s30, 0
      %p129 = por %p127, %p128
      %p130 = scmp.ne.s32.totalorder %s116, %s117
      %p131 = scmp.eq.s32.totalorder %s31, 1
      %p132 = por %p130, %p131
      %p134 = scmp.ne.s32.totalorder %s117, %s133
      %p135 = scmp.eq.s32.totalorder %s31, 0
      %p136 = por %p134, %p135
      %s138 = sadd.s32 %s137, 1
      %p141 = scmp.eq.s32.totalorder %s25, 1
      %p142 = scmp.ne.s32.totalorder %s137, %s139
      %p143 = scmp.eq.s32.totalorder %s25, 0
      %p144 = por %p142, %p143
      %p145 = scmp.ne.s32.totalorder %s137, %s139
      %p146 = scmp.eq.s32.totalorder %s30, 1
      %p147 = por %p145, %p146
      %p148 = scmp.ne.s32.totalorder %s139, %s140
      %p149 = scmp.eq.s32.totalorder %s30, 0
      %p150 = por %p148, %p149
      %p151 = scmp.ne.s32.totalorder %s139, %s140
      %p152 = scmp.eq.s32.totalorder %s31, 1
      %p153 = por %p151, %p152
      %p155 = scmp.ne.s32.totalorder %s140, %s154
      %p156 = scmp.eq.s32.totalorder %s31, 0
      %p157 = por %p155, %p156
      %s159 = sadd.s32 %s158, 1
      %p162 = scmp.eq.s32.totalorder %s25, 1
      %p163 = scmp.ne.s32.totalorder %s158, %s160
      %p164 = scmp.eq.s32.totalorder %s25, 0
      %p165 = por %p163, %p164
      %p166 = scmp.ne.s32.totalorder %s158, %s160
      %p167 = scmp.eq.s32.totalorder %s30, 1
      %p168 = por %p166, %p167
      %p169 = scmp.ne.s32.totalorder %s160, %s161
      %p170 = scmp.eq.s32.totalorder %s30, 0
      %p171 = por %p169, %p170
      %p172 = scmp.ne.s32.totalorder %s160, %s161
      %p173 = scmp.eq.s32.totalorder %s31, 1
      %p174 = por %p172, %p173
      %p176 = scmp.ne.s32.totalorder %s161, %s175
      %p177 = scmp.eq.s32.totalorder %s31, 0
      %p178 = por %p176, %p177
      %s180 = sadd.s32 %s179, 1
      %p183 = scmp.eq.s32.totalorder %s25, 1
      %p184 = scmp.ne.s32.totalorder %s179, %s181
      %p185 = scmp.eq.s32.totalorder %s25, 0
      %p186 = por %p184, %p185
      %p187 = scmp.ne.s32.totalorder %s179, %s181
      %p188 = scmp.eq.s32.totalorder %s30, 1
      %p189 = por %p187, %p188
      %p190 = scmp.ne.s32.totalorder %s181, %s182
      %p191 = scmp.eq.s32.totalorder %s30, 0
      %p192 = por %p190, %p191
      %p193 = scmp.ne.s32.totalorder %s181, %s182
      %p194 = scmp.eq.s32.totalorder %s31, 1
      %p195 = por %p193, %p194
      %p197 = scmp.ne.s32.totalorder %s182, %s196
      %p198 = scmp.eq.s32.totalorder %s31, 0
      %p199 = por %p197, %p198
      %s201 = sadd.s32 %s200, 1
      %p204 = scmp.eq.s32.totalorder %s25, 1
      %p205 = scmp.ne.s32.totalorder %s200, %s202
      %p206 = scmp.eq.s32.totalorder %s25, 0
      %p207 = por %p205, %p206
      %p208 = scmp.ne.s32.totalorder %s200, %s202
      %p209 = scmp.eq.s32.totalorder %s30, 1
      %p210 = por %p208, %p209
      %p211 = scmp.ne.s32.totalorder %s202, %s203
      %p212 = scmp.eq.s32.totalorder %s30, 0
      %p213 = por %p211, %p212
      %p214 = scmp.ne.s32.totalorder %s202, %s203
      %p215 = scmp.eq.s32.totalorder %s31, 1
      %p216 = por %p214, %p215
      %p218 = scmp.ne.s32.totalorder %s203, %s217
      %p219 = scmp.eq.s32.totalorder %s31, 0
      %p220 = por %p218, %p219
      %s222 = sadd.s32 %s221, 1
      %p225 = scmp.eq.s32.totalorder %s25, 1
      %p226 = scmp.ne.s32.totalorder %s221, %s223
      %p227 = scmp.eq.s32.totalorder %s25, 0
      %p228 = por %p226, %p227
      %p229 = scmp.ne.s32.totalorder %s221, %s223
      %p230 = scmp.eq.s32.totalorder %s30, 1
      %p231 = por %p229, %p230
      %p232 = scmp.ne.s32.totalorder %s223, %s224
      %p233 = scmp.eq.s32.totalorder %s30, 0
      %p234 = por %p232, %p233
      %p235 = scmp.ne.s32.totalorder %s223, %s224
      %p236 = scmp.eq.s32.totalorder %s31, 1
      %p237 = por %p235, %p236
      %p239 = scmp.ne.s32.totalorder %s224, %s238
      %p240 = scmp.eq.s32.totalorder %s31, 0
      %p241 = por %p239, %p240
      %s243 = sadd.s32 %s242, 1
      %p246 = scmp.eq.s32.totalorder %s25, 1
      %p247 = scmp.ne.s32.totalorder %s242, %s244
      %p248 = scmp.eq.s32.totalorder %s25, 0
      %p249 = por %p247, %p248
      %p250 = scmp.ne.s32.totalorder %s242, %s244
      %p251 = scmp.eq.s32.totalorder %s30, 1
      %p252 = por %p250, %p251
      %p253 = scmp.ne.s32.totalorder %s244, %s245
      %p254 = scmp.eq.s32.totalorder %s30, 0
      %p255 = por %p253, %p254
      %p256 = scmp.ne.s32.totalorder %s244, %s245
      %p257 = scmp.eq.s32.totalorder %s31, 1
      %p258 = por %p256, %p257
      %p260 = scmp.ne.s32.totalorder %s245, %s259
      %p261 = scmp.eq.s32.totalorder %s31, 0
      %p262 = por %p260, %p261
      %s264 = sadd.s32 %s263, 1
      %p267 = scmp.eq.s32.totalorder %s25, 1
      %p268 = scmp.ne.s32.totalorder %s263, %s265
      %p269 = scmp.eq.s32.totalorder %s25, 0
      %p270 = por %p268, %p269
      %p271 = scmp.ne.s32.totalorder %s263, %s265
      %p272 = scmp.eq.s32.totalorder %s30, 1
      %p273 = por %p271, %p272
      %p274 = scmp.ne.s32.totalorder %s265, %s266
      %p275 = scmp.eq.s32.totalorder %s30, 0
      %p276 = por %p274, %p275
      %p277 = scmp.ne.s32.totalorder %s265, %s266
      %p278 = scmp.eq.s32.totalorder %s31, 1
      %p279 = por %p277, %p278
      %p281 = scmp.ne.s32.totalorder %s266, %s280
      %p282 = scmp.eq.s32.totalorder %s31, 0
      %p283 = por %p281, %p282
      %s285 = sadd.s32 %s284, 1
      %p288 = scmp.eq.s32.totalorder %s25, 1
      %p289 = scmp.ne.s32.totalorder %s284, %s286
      %p290 = scmp.eq.s32.totalorder %s25, 0
      %p291 = por %p289, %p290
      %p292 = scmp.ne.s32.totalorder %s284, %s286
      %p293 = scmp.eq.s32.totalorder %s30, 1
      %p294 = por %p292, %p293
      %p295 = scmp.ne.s32.totalorder %s286, %s287
      %p296 = scmp.eq.s32.totalorder %s30, 0
      %p297 = por %p295, %p296
      %p298 = scmp.ne.s32.totalorder %s286, %s287
      %p299 = scmp.eq.s32.totalorder %s31, 1
      %p300 = por %p298, %p299
      %p302 = scmp.ne.s32.totalorder %s287, %s301
      %p303 = scmp.eq.s32.totalorder %s31, 0
      %p304 = por %p302, %p303
      %s306 = sadd.s32 %s305, 1
      %p309 = scmp.eq.s32.totalorder %s25, 1
      %p310 = scmp.ne.s32.totalorder %s305, %s307
      %p311 = scmp.eq.s32.totalorder %s25, 0
      %p312 = por %p310, %p311
      %p313 = scmp.ne.s32.totalorder %s305, %s307
      %p314 = scmp.eq.s32.totalorder %s30, 1
      %p315 = por %p313, %p314
      %p316 = scmp.ne.s32.totalorder %s307, %s308
      %p317 = scmp.eq.s32.totalorder %s30, 0
      %p318 = por %p316, %p317
      %p319 = scmp.ne.s32.totalorder %s307, %s308
      %p320 = scmp.eq.s32.totalorder %s31, 1
      %p321 = por %p319, %p320
      %p323 = scmp.ne.s32.totalorder %s308, %s322
      %p324 = scmp.eq.s32.totalorder %s31, 0
      %p325 = por %p323, %p324
      %s327 = sadd.s32 %s326, 1
      %p330 = scmp.eq.s32.totalorder %s25, 1
      %p331 = scmp.ne.s32.totalorder %s326, %s328
      %p332 = scmp.eq.s32.totalorder %s25, 0
      %p333 = por %p331, %p332
      %p334 = scmp.ne.s32.totalorder %s326, %s328
      %p335 = scmp.eq.s32.totalorder %s30, 1
      %p336 = por %p334, %p335
      %p337 = scmp.ne.s32.totalorder %s328, %s329
      %p338 = scmp.eq.s32.totalorder %s30, 0
      %p339 = por %p337, %p338
      %p340 = scmp.ne.s32.totalorder %s328, %s329
      %p341 = scmp.eq.s32.totalorder %s31, 1
      %p342 = por %p340, %p341
      %p344 = scmp.ne.s32.totalorder %s329, %s343
      %p345 = scmp.eq.s32.totalorder %s31, 0
      %p346 = por %p344, %p345
      %s348 = sadd.s32 %s347, 1
      %p351 = scmp.eq.s32.totalorder %s25, 1
      %p352 = scmp.ne.s32.totalorder %s347, %s349
      %p353 = scmp.eq.s32.totalorder %s25, 0
      %p354 = por %p352, %p353
      %p355 = scmp.ne.s32.totalorder %s347, %s349
      %p356 = scmp.eq.s32.totalorder %s30, 1
      %p357 = por %p355, %p356
      %p358 = scmp.ne.s32.totalorder %s349, %s350
      %p359 = scmp.eq.s32.totalorder %s30, 0
      %p360 = por %p358, %p359
      %p361 = scmp.ne.s32.totalorder %s349, %s350
      %p362 = scmp.eq.s32.totalorder %s31, 1
      %p363 = por %p361, %p362
      %p365 = scmp.ne.s32.totalorder %s350, %s364
      %p366 = scmp.eq.s32.totalorder %s31, 0
      %p367 = por %p365, %p366
      %s369 = sadd.s32 %s368, 1
      %p372 = scmp.eq.s32.totalorder %s25, 1
      %p373 = scmp.ne.s32.totalorder %s368, %s370
      %p374 = scmp.eq.s32.totalorder %s25, 0
      %p375 = por %p373, %p374
      %p376 = scmp.ne.s32.totalorder %s368, %s370
      %p377 = scmp.eq.s32.totalorder %s30, 1
      %p378 = por %p376, %p377
      %p379 = scmp.ne.s32.totalorder %s370, %s371
      %p380 = scmp.eq.s32.totalorder %s30, 0
      %p381 = por %p379, %p380
      %p382 = scmp.ne.s32.totalorder %s370, %s371
      %p383 = scmp.eq.s32.totalorder %s31, 1
      %p384 = por %p382, %p383
      %p386 = scmp.ne.s32.totalorder %s371, %s385
      %p387 = scmp.eq.s32.totalorder %s31, 0
      %p388 = por %p386, %p387
      %s389 = ssub.s32 %s25, %s32
      %p390 = scmp.eq.s32.totalorder %s389, 0
      %s392 = sadd.s32 %s391, 1
      %s393 = scalar_select %p390, %s391, %s392
      %p396 = pneg %p390
      %p397 = scmp.eq.s32.totalorder %s25, 1
      %p398 = por %p396, %p397
      %p399 = scmp.ne.s32.totalorder %s391, %s394
      %p400 = scmp.eq.s32.totalorder %s25, 0
      %p401 = por %p399, %p400
      %p402 = scmp.ne.s32.totalorder %s391, %s394
      %p403 = scmp.eq.s32.totalorder %s30, 1
      %p404 = por %p402, %p403
      %p405 = scmp.ne.s32.totalorder %s394, %s395
      %p406 = scmp.eq.s32.totalorder %s30, 0
      %p407 = por %p405, %p406
      %p408 = scmp.ne.s32.totalorder %s394, %s395
      %p409 = scmp.eq.s32.totalorder %s31, 1
      %p410 = por %p408, %p409
      %p412 = scmp.ne.s32.totalorder %s395, %s411
      %p413 = scmp.eq.s32.totalorder %s31, 0
      %p414 = por %p412, %p413
      %p415 = scmp.le.s32.totalorder 1, %s25
      %p416 = scmp.lt.s32.totalorder %s25, 3
      %p417 = pnand %p415, %p416
      %p418 = pneg %p417
      // Predicated region
      $region9: #{tpu_custom_call.1} parent=5 // pred_check
        _
      $region10: #{tpu_custom_call.1} parent=5 // pred_check_branch
        %420 = sbr.rel (%p417) target = $region12
      $region11: #{tpu_custom_call.1} parent=5 // pred_region
        %s421 = ssub.s32 %s25, 1
        // Predicated region
        $region13: #{tpu_custom_call.1} parent=11 // pred_check
          %p422 = pneg %p150
        $region14: #{tpu_custom_call.1} parent=11 // pred_check_branch
          %424 = sbr.rel (%p422) target = $region16
        $region15: #{tpu_custom_call.1} parent=11 // pred_region
          _
        $region16: #{tpu_custom_call.1} parent=11 // pred_fallthru
          _
        // Predicated region
        $region17: #{tpu_custom_call.1} parent=11 // pred_check
          %p425 = pneg %p171
        $region18: #{tpu_custom_call.1} parent=11 // pred_check_branch
          %427 = sbr.rel (%p425) target = $region20
        $region19: #{tpu_custom_call.1} parent=11 // pred_region
          _
        $region20: #{tpu_custom_call.1} parent=11 // pred_fallthru
          _
        // Predicated region
        $region21: #{tpu_custom_call.1} parent=11 // pred_check
          %p428 = pneg %p192
        $region22: #{tpu_custom_call.1} parent=11 // pred_check_branch
          %430 = sbr.rel (%p428) target = $region24
        $region23: #{tpu_custom_call.1} parent=11 // pred_region
          _
        $region24: #{tpu_custom_call.1} parent=11 // pred_fallthru
          _
        // Predicated region
        $region25: #{tpu_custom_call.1} parent=11 // pred_check
          %p431 = pneg %p213
        $region26: #{tpu_custom_call.1} parent=11 // pred_check_branch
          %433 = sbr.rel (%p431) target = $region28
        $region27: #{tpu_custom_call.1} parent=11 // pred_region
          _
        $region28: #{tpu_custom_call.1} parent=11 // pred_fallthru
          _
        // Predicated region
        $region29: #{tpu_custom_call.1} parent=11 // pred_check
          %p434 = pneg %p234
        $region30: #{tpu_custom_call.1} parent=11 // pred_check_branch
          %436 = sbr.rel (%p434) target = $region32
        $region31: #{tpu_custom_call.1} parent=11 // pred_region
          _
        $region32: #{tpu_custom_call.1} parent=11 // pred_fallthru
          _
        // Predicated region
        $region33: #{tpu_custom_call.1} parent=11 // pred_check
          %p437 = pneg %p255
        $region34: #{tpu_custom_call.1} parent=11 // pred_check_branch
          %439 = sbr.rel (%p437) target = $region36
        $region35: #{tpu_custom_call.1} parent=11 // pred_region
          _
        $region36: #{tpu_custom_call.1} parent=11 // pred_fallthru
          _
        // Predicated region
        $region37: #{tpu_custom_call.1} parent=11 // pred_check
          %p440 = pneg %p276
        $region38: #{tpu_custom_call.1} parent=11 // pred_check_branch
          %442 = sbr.rel (%p440) target = $region40
        $region39: #{tpu_custom_call.1} parent=11 // pred_region
          _
        $region40: #{tpu_custom_call.1} parent=11 // pred_fallthru
          _
        // Predicated region
        $region41: #{tpu_custom_call.1} parent=11 // pred_check
          %p443 = pneg %p297
        $region42: #{tpu_custom_call.1} parent=11 // pred_check_branch
          %445 = sbr.rel (%p443) target = $region44
        $region43: #{tpu_custom_call.1} parent=11 // pred_region
          _
        $region44: #{tpu_custom_call.1} parent=11 // pred_fallthru
          _
        // Predicated region
        $region45: #{tpu_custom_call.1} parent=11 // pred_check
          %p446 = pneg %p318
        $region46: #{tpu_custom_call.1} parent=11 // pred_check_branch
          %448 = sbr.rel (%p446) target = $region48
        $region47: #{tpu_custom_call.1} parent=11 // pred_region
          _
        $region48: #{tpu_custom_call.1} parent=11 // pred_fallthru
          _
        // Predicated region
        $region49: #{tpu_custom_call.1} parent=11 // pred_check
          %p449 = pneg %p339
        $region50: #{tpu_custom_call.1} parent=11 // pred_check_branch
          %451 = sbr.rel (%p449) target = $region52
        $region51: #{tpu_custom_call.1} parent=11 // pred_region
          _
        $region52: #{tpu_custom_call.1} parent=11 // pred_fallthru
          _
        // Predicated region
        $region53: #{tpu_custom_call.1} parent=11 // pred_check
          %p452 = pneg %p360
        $region54: #{tpu_custom_call.1} parent=11 // pred_check_branch
          %454 = sbr.rel (%p452) target = $region56
        $region55: #{tpu_custom_call.1} parent=11 // pred_region
          _
        $region56: #{tpu_custom_call.1} parent=11 // pred_fallthru
          _
        // Predicated region
        $region57: #{tpu_custom_call.1} parent=11 // pred_check
          %p455 = pneg %p381
        $region58: #{tpu_custom_call.1} parent=11 // pred_check_branch
          %457 = sbr.rel (%p455) target = $region60
        $region59: #{tpu_custom_call.1} parent=11 // pred_region
          _
        $region60: #{tpu_custom_call.1} parent=11 // pred_fallthru
          _
      $region12: #{tpu_custom_call.1} parent=5 // pred_fallthru
        _
      %p458 = scmp.lt.s32.totalorder %s25, 2
      // Predicated region
      $region61: #{tpu_custom_call.1} parent=5 // pred_check
        %p459 = pneg %p458
      $region62: #{tpu_custom_call.1} parent=5 // pred_check_branch
        %461 = sbr.rel (%p459) target = $region64
      $region63: #{tpu_custom_call.1} parent=5 // pred_region
        // Predicated region
        $region65: #{tpu_custom_call.1} parent=63 // pred_check
          %p462 = pneg %p45
        $region66: #{tpu_custom_call.1} parent=63 // pred_check_branch
          %464 = sbr.rel (%p462) target = $region68
        $region67: #{tpu_custom_call.1} parent=63 // pred_region
          %p465 = scmp.lt.s32.totalorder %s25, 1
          %s466 = scalar_select %p465, %s25, 1
          %s467 = smul.addr %s466, 8
          %s468 = scalar_lea.vmem %s0, %s467
        $region68: #{tpu_custom_call.1} parent=63 // pred_fallthru
          _
        // Predicated region
        $region69: #{tpu_custom_call.1} parent=63 // pred_check
          %p469 = pneg %p71
        $region70: #{tpu_custom_call.1} parent=63 // pred_check_branch
          %471 = sbr.rel (%p469) target = $region72
        $region71: #{tpu_custom_call.1} parent=63 // pred_region
          %p472 = scmp.lt.s32.totalorder %s25, 1
          %s473 = scalar_select %p472, %s25, 1
          %s474 = smul.addr %s473, 8
          %s475 = scalar_lea.vmem %s1, %s474
        $region72: #{tpu_custom_call.1} parent=63 // pred_fallthru
          _
        // Predicated region
        $region73: #{tpu_custom_call.1} parent=63 // pred_check
          %p476 = pneg %p97
        $region74: #{tpu_custom_call.1} parent=63 // pred_check_branch
          %478 = sbr.rel (%p476) target = $region76
        $region75: #{tpu_custom_call.1} parent=63 // pred_region
          %p479 = scmp.lt.s32.totalorder %s25, 1
          %s480 = scalar_select %p479, %s25, 1
          %s481 = smul.addr %s480, 4
          %s482 = scalar_lea.vmem %s2, %s481
        $region76: #{tpu_custom_call.1} parent=63 // pred_fallthru
          _
        // Predicated region
        $region77: #{tpu_custom_call.1} parent=63 // pred_check
          %p483 = pneg %p123
        $region78: #{tpu_custom_call.1} parent=63 // pred_check_branch
          %485 = sbr.rel (%p483) target = $region80
        $region79: #{tpu_custom_call.1} parent=63 // pred_region
          %p486 = scmp.lt.s32.totalorder %s25, 1
          %s487 = scalar_select %p486, %s25, 1
          %s488 = smul.addr %s487, 4
          %s489 = scalar_lea.vmem %s3, %s488
        $region80: #{tpu_custom_call.1} parent=63 // pred_fallthru
          _
      $region64: #{tpu_custom_call.1} parent=5 // pred_fallthru
        _
      %p490 = scmp.le.s32.totalorder 1, %s25
      %p491 = scmp.lt.s32.totalorder %s25, 3
      %p492 = pnand %p490, %p491
      %p493 = pneg %p492
      // Predicated region
      $region81: #{tpu_custom_call.1} parent=5 // pred_check
        _
      $region82: #{tpu_custom_call.1} parent=5 // pred_check_branch
        %495 = sbr.rel (%p492) target = $region84
      $region83: #{tpu_custom_call.1} parent=5 // pred_region
        %s496 = ssub.s32 %s25, 1
        %p497 = scmp.lt.s32.totalorder %s30, 1
        %s498 = scalar_select %p497, %s30, 1
        %s499 = smul.addr %s498, 8
        %s500 = scalar_lea.vmem %s0, %s499
        %p501 = pneg %p51
        %p502 = pneg %p48
        %p503 = scmp.lt.s32.totalorder %s30, 1
        %s504 = scalar_select %p503, %s30, 1
        %s505 = smul.addr %s504, 8
        %s506 = scalar_lea.vmem %s1, %s505
        %p507 = pneg %p77
        %p508 = pneg %p74
        %p509 = scmp.lt.s32.totalorder %s30, 1
        %s510 = scalar_select %p509, %s30, 1
        %s511 = smul.addr %s510, 4
        %s512 = scalar_lea.vmem %s2, %s511
        %p513 = pneg %p103
        %p514 = pneg %p100
        %p515 = scmp.lt.s32.totalorder %s30, 1
        %s516 = scalar_select %p515, %s30, 1
        %s517 = smul.addr %s516, 4
        %s518 = scalar_lea.vmem %s3, %s517
        %p519 = pneg %p129
        %p520 = pneg %p126
        %p521 = pneg %p150
        %p522 = pneg %p147
        %p523 = pneg %p171
        %p524 = pneg %p168
        %p525 = pneg %p192
        %p526 = pneg %p189
        %p527 = pneg %p213
        %p528 = pneg %p210
        %p529 = pneg %p234
        %p530 = pneg %p231
        %p531 = pneg %p255
        %p532 = pneg %p252
        %p533 = pneg %p276
        %p534 = pneg %p273
        %p535 = pneg %p297
        %p536 = pneg %p294
        %p537 = pneg %p318
        %p538 = pneg %p315
        %p539 = pneg %p339
        %p540 = pneg %p336
        %p541 = pneg %p360
        %p542 = pneg %p357
        %p543 = pneg %p381
        %p544 = pneg %p378
        %p545 = pneg %p407
        %p546 = pneg %p404
        %s547 = sand.u32 %s394, 1
        %s548 = scalar_lea.sflag [#allocation3], %s547
        %s549 = sand.u32 %s394, 1
        %s550 = smul.addr %s549, 8
        %s551 = scalar_lea.vmem [#allocation2], %s550
        %p552 = scmp.lt.s32.totalorder %s30, 1
        %s553 = scalar_select %p552, %s30, 1
        %s554 = smul.addr %s553, 8
        %s555 = scalar_lea.vmem %s0, %s554
        %p556 = scmp.lt.s32.totalorder %s30, 1
        %s557 = scalar_select %p556, %s30, 1
        %s558 = smul.addr %s557, 8
        %s559 = scalar_lea.vmem %s1, %s558
        %p560 = scmp.lt.s32.totalorder %s30, 1
        %s561 = scalar_select %p560, %s30, 1
        %s562 = smul.addr %s561, 4
        %s563 = scalar_lea.vmem %s2, %s562
        %p564 = scmp.lt.s32.totalorder %s30, 1
        %s565 = scalar_select %p564, %s30, 1
        %s566 = smul.addr %s565, 4
        %s567 = scalar_lea.vmem %s3, %s566
        %v568 = vld [vmem:[%s555] sm:$0xff]
        %v569 = vld [vmem:[%s559] sm:$0xff]
        %v570 = vld [vmem:[%s4] sm:$0xff]
        %v571 = vld [vmem:[%s4 + $0x8] sm:$0xff]
        %v572 = vld [vmem:[%s4 + $0x10] sm:$0xff]
        %v573 = vld [vmem:[%s4 + $0x18] sm:$0xff]
        %v574 = vld [vmem:[%s4 + $0x20] sm:$0xff]
        %v575 = vld [vmem:[%s4 + $0x28] sm:$0xff]
        %v576 = vld [vmem:[%s4 + $0x30] sm:$0xff]
        %v577 = vld [vmem:[%s4 + $0x38] sm:$0xff]
        %v578 = vld [vmem:[%s4 + $0x40] sm:$0xff]
        %v579 = vld [vmem:[%s4 + $0x48] sm:$0xff]
        %v580 = vld [vmem:[%s4 + $0x50] sm:$0xff]
        %v581 = vld [vmem:[%s4 + $0x58] sm:$0xff]
        %v582 = vld [vmem:[%s4 + $0x60] sm:$0xff]
        %v583 = vld [vmem:[%s4 + $0x68] sm:$0xff]
        %v584 = vld [vmem:[%s4 + $0x70] sm:$0xff]
        %v585 = vld [vmem:[%s4 + $0x78] sm:$0xff]
        %v586 = vld [vmem:[%s7] sm:$0x1]
        %v587 = vld [vmem:[%s7 + $0x1] sm:$0x1]
        %v588 = vld [vmem:[%s7 + $0x2] sm:$0x1]
        %v589 = vld [vmem:[%s7 + $0x3] sm:$0x1]
        %v594 = vlaneseq
        %v595 = vshrl.u32 %v594, 7
        %v596 = vsub.s32 0, %v595
        %v597 = vrot.slane %v586, %v596
        %v598 = vlaneseq
        %v599 = vshrl.u32 %v598, 7
        %v600 = vsub.s32 0, %v599
        %v601 = vrot.slane %v587, %v600
        %v602 = vlaneseq
        %v603 = vshrl.u32 %v602, 7
        %v604 = vsub.s32 0, %v603
        %v605 = vrot.slane %v588, %v604
        %v606 = vlaneseq
        %v607 = vshrl.u32 %v606, 7
        %v608 = vsub.s32 0, %v607
        %v609 = vrot.slane %v589, %v608
        %vm614 = vcmask 261120
        %v616 = vsel %vm614, %v568, 0
        %618 = vmatprep.subr.mxu0 0.0
        %619 = vmatpush1.msra.mxu0 %v570
        %620 = vmatprep.subr.mxu0 0.0
        %621 = vmatpush1.msra.mxu0 %v571
        %622 = vmatprep.subr.mxu0 0.0
        %623 = vmatpush1.msra.mxu0 %v572
        %624 = vmatprep.subr.mxu0 0.0
        %625 = vmatpush1.msra.mxu0 %v573
        %626 = vmatprep.subr.mxu0 0.0
        %627 = vmatpush1.msra.mxu0 0.0
        %628 = vmatprep.subr.mxu0 0.0
        %629 = vmatpush1.msra.mxu0 0.0
        %630 = vmatprep.subr.mxu0 0.0
        %631 = vmatpush1.msra.mxu0 0.0
        %632 = vmatprep.subr.mxu0 0.0
        %633 = vmatpush1.msra.mxu0 0.0
        %634 = vmatprep.subr.mxu0 0.0
        %635 = vmatpush1.msra.mxu0 0.0
        %636 = vmatprep.subr.mxu0 0.0
        %637 = vmatpush1.msra.mxu0 0.0
        %638 = vmatprep.subr.mxu0 0.0
        %639 = vmatpush1.msra.mxu0 0.0
        %640 = vmatprep.subr.mxu0 0.0
        %641 = vmatpush1.msra.mxu0 0.0
        %642 = vmatprep.subr.mxu0 0.0
        %643 = vmatpush1.msra.mxu0 0.0
        %644 = vmatprep.subr.mxu0 0.0
        %645 = vmatpush1.msra.mxu0 0.0
        %646 = vmatprep.subr.mxu0 0.0
        %647 = vmatpush1.msra.mxu0 0.0
        %648 = vmatprep.subr.mxu0 0.0
        %649 = vmatpush1.msra.mxu0 0.0
        %650 = vmatprep.subr.mxu0 0.0
        %651 = vmatpush1.msra.mxu0 0.0
        %652 = vmatprep.subr.mxu0 0.0
        %653 = vmatpush1.msra.mxu0 0.0
        %654 = vmatprep.subr.mxu0 0.0
        %655 = vmatpush1.msra.mxu0 0.0
        %656 = vmatprep.subr.mxu0 0.0
        %657 = vmatpush1.msra.mxu0 0.0
        %658 = vmatprep.subr.mxu0 0.0
        %659 = vmatpush1.msra.mxu0 0.0
        %660 = vmatprep.subr.mxu0 0.0
        %661 = vmatpush1.msra.mxu0 0.0
        %662 = vmatprep.subr.mxu0 0.0
        %663 = vmatpush1.msra.mxu0 0.0
        %664 = vmatprep.subr.mxu0 0.0
        %665 = vmatpush1.msra.mxu0 0.0
        %666 = vmatprep.subr.mxu0 0.0
        %667 = vmatpush1.msra.mxu0 0.0
        %668 = vmatprep.subr.mxu0 0.0
        %669 = vmatpush1.msra.mxu0 0.0
        %670 = vmatprep.subr.mxu0 0.0
        %671 = vmatpush1.msra.mxu0 0.0
        %672 = vmatprep.subr.mxu0 0.0
        %673 = vmatpush1.msra.mxu0 0.0
        %674 = vmatprep.subr.mxu0 0.0
        %675 = vmatpush1.msra.mxu0 0.0
        %676 = vmatprep.subr.mxu0 0.0
        %677 = vmatpush1.msra.mxu0 0.0
        %678 = vmatprep.subr.mxu0 0.0
        %679 = vmatpush1.msra.mxu0 0.0
        %680 = vmatprep.subr.mxu0 0.0
        %681 = vmatpush1.msra.mxu0 0.0
        %682 = vmatprep.mubr.f32.mxu0 0.0
        %683 = vmatmul.mubr.f32.gmra.mrb[0].mxu0 %v616
        %v684 = vpop.f32.mrb[0].mxu0
        %v685 = vadd.f32 %v597, %v684
        %v686 = vpop.f32.mrb[0].mxu0
        %687 = vdwg.mxu0
        %688 = vmatprep.subr.mxu0 0.0
        %689 = vmatpush1.msra.mxu0 %v574
        %690 = vmatprep.subr.mxu0 0.0
        %691 = vmatpush1.msra.mxu0 %v575
        %692 = vmatprep.subr.mxu0 0.0
        %693 = vmatpush1.msra.mxu0 %v576
        %694 = vmatprep.subr.mxu0 0.0
        %695 = vmatpush1.msra.mxu0 %v577
        %696 = vmatprep.subr.mxu0 0.0
        %697 = vmatpush1.msra.mxu0 0.0
        %698 = vmatprep.subr.mxu0 0.0
        %699 = vmatpush1.msra.mxu0 0.0
        %700 = vmatprep.subr.mxu0 0.0
        %701 = vmatpush1.msra.mxu0 0.0
        %702 = vmatprep.subr.mxu0 0.0
        %703 = vmatpush1.msra.mxu0 0.0
        %704 = vmatprep.subr.mxu0 0.0
        %705 = vmatpush1.msra.mxu0 0.0
        %706 = vmatprep.subr.mxu0 0.0
        %707 = vmatpush1.msra.mxu0 0.0
        %708 = vmatprep.subr.mxu0 0.0
        %709 = vmatpush1.msra.mxu0 0.0
        %710 = vmatprep.subr.mxu0 0.0
        %711 = vmatpush1.msra.mxu0 0.0
        %712 = vmatprep.subr.mxu0 0.0
        %713 = vmatpush1.msra.mxu0 0.0
        %714 = vmatprep.subr.mxu0 0.0
        %715 = vmatpush1.msra.mxu0 0.0
        %716 = vmatprep.subr.mxu0 0.0
        %717 = vmatpush1.msra.mxu0 0.0
        %718 = vmatprep.subr.mxu0 0.0
        %719 = vmatpush1.msra.mxu0 0.0
        %720 = vmatprep.subr.mxu0 0.0
        %721 = vmatpush1.msra.mxu0 0.0
        %722 = vmatprep.subr.mxu0 0.0
        %723 = vmatpush1.msra.mxu0 0.0
        %724 = vmatprep.subr.mxu0 0.0
        %725 = vmatpush1.msra.mxu0 0.0
        %726 = vmatprep.subr.mxu0 0.0
        %727 = vmatpush1.msra.mxu0 0.0
        %728 = vmatprep.subr.mxu0 0.0
        %729 = vmatpush1.msra.mxu0 0.0
        %730 = vmatprep.subr.mxu0 0.0
        %731 = vmatpush1.msra.mxu0 0.0
        %732 = vmatprep.subr.mxu0 0.0
        %733 = vmatpush1.msra.mxu0 0.0
        %734 = vmatprep.subr.mxu0 0.0
        %735 = vmatpush1.msra.mxu0 0.0
        %736 = vmatprep.subr.mxu0 0.0
        %737 = vmatpush1.msra.mxu0 0.0
        %738 = vmatprep.subr.mxu0 0.0
        %739 = vmatpush1.msra.mxu0 0.0
        %740 = vmatprep.subr.mxu0 0.0
        %741 = vmatpush1.msra.mxu0 0.0
        %742 = vmatprep.subr.mxu0 0.0
        %743 = vmatpush1.msra.mxu0 0.0
        %744 = vmatprep.subr.mxu0 0.0
        %745 = vmatpush1.msra.mxu0 0.0
        %746 = vmatprep.subr.mxu0 0.0
        %747 = vmatpush1.msra.mxu0 0.0
        %748 = vmatprep.subr.mxu0 0.0
        %749 = vmatpush1.msra.mxu0 0.0
        %750 = vmatprep.subr.mxu0 0.0
        %751 = vmatpush1.msra.mxu0 0.0
        %752 = vmatprep.mubr.f32.mxu0 0.0
        %753 = vmatmul.mubr.f32.gmra.mrb[0].mxu0 %v616
        %v754 = vpop.f32.mrb[0].mxu0
        %v755 = vadd.f32 %v601, %v754
        %v756 = vpop.f32.mrb[0].mxu0
        %757 = vdwg.mxu0
        %758 = vmatprep.subr.mxu0 0.0
        %759 = vmatpush1.msra.mxu0 %v578
        %760 = vmatprep.subr.mxu0 0.0
        %761 = vmatpush1.msra.mxu0 %v579
        %762 = vmatprep.subr.mxu0 0.0
        %763 = vmatpush1.msra.mxu0 %v580
        %764 = vmatprep.subr.mxu0 0.0
        %765 = vmatpush1.msra.mxu0 %v581
        %766 = vmatprep.subr.mxu0 0.0
        %767 = vmatpush1.msra.mxu0 0.0
        %768 = vmatprep.subr.mxu0 0.0
        %769 = vmatpush1.msra.mxu0 0.0
        %770 = vmatprep.subr.mxu0 0.0
        %771 = vmatpush1.msra.mxu0 0.0
        %772 = vmatprep.subr.mxu0 0.0
        %773 = vmatpush1.msra.mxu0 0.0
        %774 = vmatprep.subr.mxu0 0.0
        %775 = vmatpush1.msra.mxu0 0.0
        %776 = vmatprep.subr.mxu0 0.0
        %777 = vmatpush1.msra.mxu0 0.0
        %778 = vmatprep.subr.mxu0 0.0
        %779 = vmatpush1.msra.mxu0 0.0
        %780 = vmatprep.subr.mxu0 0.0
        %781 = vmatpush1.msra.mxu0 0.0
        %782 = vmatprep.subr.mxu0 0.0
        %783 = vmatpush1.msra.mxu0 0.0
        %784 = vmatprep.subr.mxu0 0.0
        %785 = vmatpush1.msra.mxu0 0.0
        %786 = vmatprep.subr.mxu0 0.0
        %787 = vmatpush1.msra.mxu0 0.0
        %788 = vmatprep.subr.mxu0 0.0
        %789 = vmatpush1.msra.mxu0 0.0
        %790 = vmatprep.subr.mxu0 0.0
        %791 = vmatpush1.msra.mxu0 0.0
        %792 = vmatprep.subr.mxu0 0.0
        %793 = vmatpush1.msra.mxu0 0.0
        %794 = vmatprep.subr.mxu0 0.0
        %795 = vmatpush1.msra.mxu0 0.0
        %796 = vmatprep.subr.mxu0 0.0
        %797 = vmatpush1.msra.mxu0 0.0
        %798 = vmatprep.subr.mxu0 0.0
        %799 = vmatpush1.msra.mxu0 0.0
        %800 = vmatprep.subr.mxu0 0.0
        %801 = vmatpush1.msra.mxu0 0.0
        %802 = vmatprep.subr.mxu0 0.0
        %803 = vmatpush1.msra.mxu0 0.0
        %804 = vmatprep.subr.mxu0 0.0
        %805 = vmatpush1.msra.mxu0 0.0
        %806 = vmatprep.subr.mxu0 0.0
        %807 = vmatpush1.msra.mxu0 0.0
        %808 = vmatprep.subr.mxu0 0.0
        %809 = vmatpush1.msra.mxu0 0.0
        %810 = vmatprep.subr.mxu0 0.0
        %811 = vmatpush1.msra.mxu0 0.0
        %812 = vmatprep.subr.mxu0 0.0
        %813 = vmatpush1.msra.mxu0 0.0
        %814 = vmatprep.subr.mxu0 0.0
        %815 = vmatpush1.msra.mxu0 0.0
        %816 = vmatprep.subr.mxu0 0.0
        %817 = vmatpush1.msra.mxu0 0.0
        %818 = vmatprep.subr.mxu0 0.0
        %819 = vmatpush1.msra.mxu0 0.0
        %820 = vmatprep.subr.mxu0 0.0
        %821 = vmatpush1.msra.mxu0 0.0
        %822 = vmatprep.mubr.f32.mxu0 0.0
        %823 = vmatmul.mubr.f32.gmra.mrb[0].mxu0 %v616
        %v824 = vpop.f32.mrb[0].mxu0
        %v825 = vadd.f32 %v605, %v824
        %v826 = vpop.f32.mrb[0].mxu0
        %827 = vdwg.mxu0
        %828 = vmatprep.subr.mxu0 0.0
        %829 = vmatpush1.msra.mxu0 %v582
        %830 = vmatprep.subr.mxu0 0.0
        %831 = vmatpush1.msra.mxu0 %v583
        %832 = vmatprep.subr.mxu0 0.0
        %833 = vmatpush1.msra.mxu0 %v584
        %834 = vmatprep.subr.mxu0 0.0
        %835 = vmatpush1.msra.mxu0 %v585
        %836 = vmatprep.subr.mxu0 0.0
        %837 = vmatpush1.msra.mxu0 0.0
        %838 = vmatprep.subr.mxu0 0.0
        %839 = vmatpush1.msra.mxu0 0.0
        %840 = vmatprep.subr.mxu0 0.0
        %841 = vmatpush1.msra.mxu0 0.0
        %842 = vmatprep.subr.mxu0 0.0
        %843 = vmatpush1.msra.mxu0 0.0
        %844 = vmatprep.subr.mxu0 0.0
        %845 = vmatpush1.msra.mxu0 0.0
        %846 = vmatprep.subr.mxu0 0.0
        %847 = vmatpush1.msra.mxu0 0.0
        %848 = vmatprep.subr.mxu0 0.0
        %849 = vmatpush1.msra.mxu0 0.0
        %850 = vmatprep.subr.mxu0 0.0
        %851 = vmatpush1.msra.mxu0 0.0
        %852 = vmatprep.subr.mxu0 0.0
        %853 = vmatpush1.msra.mxu0 0.0
        %854 = vmatprep.subr.mxu0 0.0
        %855 = vmatpush1.msra.mxu0 0.0
        %856 = vmatprep.subr.mxu0 0.0
        %857 = vmatpush1.msra.mxu0 0.0
        %858 = vmatprep.subr.mxu0 0.0
        %859 = vmatpush1.msra.mxu0 0.0
        %860 = vmatprep.subr.mxu0 0.0
        %861 = vmatpush1.msra.mxu0 0.0
        %862 = vmatprep.subr.mxu0 0.0
        %863 = vmatpush1.msra.mxu0 0.0
        %864 = vmatprep.subr.mxu0 0.0
        %865 = vmatpush1.msra.mxu0 0.0
        %866 = vmatprep.subr.mxu0 0.0
        %867 = vmatpush1.msra.mxu0 0.0
        %868 = vmatprep.subr.mxu0 0.0
        %869 = vmatpush1.msra.mxu0 0.0
        %870 = vmatprep.subr.mxu0 0.0
        %871 = vmatpush1.msra.mxu0 0.0
        %872 = vmatprep.subr.mxu0 0.0
        %873 = vmatpush1.msra.mxu0 0.0
        %874 = vmatprep.subr.mxu0 0.0
        %875 = vmatpush1.msra.mxu0 0.0
        %876 = vmatprep.subr.mxu0 0.0
        %877 = vmatpush1.msra.mxu0 0.0
        %878 = vmatprep.subr.mxu0 0.0
        %879 = vmatpush1.msra.mxu0 0.0
        %880 = vmatprep.subr.mxu0 0.0
        %881 = vmatpush1.msra.mxu0 0.0
        %882 = vmatprep.subr.mxu0 0.0
        %883 = vmatpush1.msra.mxu0 0.0
        %884 = vmatprep.subr.mxu0 0.0
        %885 = vmatpush1.msra.mxu0 0.0
        %886 = vmatprep.subr.mxu0 0.0
        %887 = vmatpush1.msra.mxu0 0.0
        %888 = vmatprep.subr.mxu0 0.0
        %889 = vmatpush1.msra.mxu0 0.0
        %890 = vmatprep.subr.mxu0 0.0
        %891 = vmatpush1.msra.mxu0 0.0
        %892 = vmatprep.mubr.f32.mxu0 0.0
        %893 = vmatmul.mubr.f32.gmra.mrb[0].mxu0 %v616
        %v894 = vpop.f32.mrb[0].mxu0
        %v895 = vadd.f32 %v609, %v894
        %v896 = vpop.f32.mrb[0].mxu0
        %897 = vdwg.mxu0
        %v898 = vld [vmem:[%s5] sm:$0xff]
        %v899 = vld [vmem:[%s5 + $0x8] sm:$0xff]
        %v900 = vld [vmem:[%s5 + $0x10] sm:$0xff]
        %v901 = vld [vmem:[%s5 + $0x18] sm:$0xff]
        %v902 = vld [vmem:[%s5 + $0x20] sm:$0xff]
        %v903 = vld [vmem:[%s5 + $0x28] sm:$0xff]
        %v904 = vld [vmem:[%s5 + $0x30] sm:$0xff]
        %v905 = vld [vmem:[%s5 + $0x38] sm:$0xff]
        %v906 = vld [vmem:[%s5 + $0x40] sm:$0xff]
        %v907 = vld [vmem:[%s5 + $0x48] sm:$0xff]
        %v908 = vld [vmem:[%s5 + $0x50] sm:$0xff]
        %v909 = vld [vmem:[%s5 + $0x58] sm:$0xff]
        %v910 = vld [vmem:[%s5 + $0x60] sm:$0xff]
        %v911 = vld [vmem:[%s5 + $0x68] sm:$0xff]
        %v912 = vld [vmem:[%s5 + $0x70] sm:$0xff]
        %v913 = vld [vmem:[%s5 + $0x78] sm:$0xff]
        %v914 = vld [vmem:[%s8] sm:$0x1]
        %v915 = vld [vmem:[%s8 + $0x1] sm:$0x1]
        %v916 = vld [vmem:[%s8 + $0x2] sm:$0x1]
        %v917 = vld [vmem:[%s8 + $0x3] sm:$0x1]
        %v922 = vlaneseq
        %v923 = vshrl.u32 %v922, 7
        %v924 = vsub.s32 0, %v923
        %v925 = vrot.slane %v914, %v924
        %v926 = vlaneseq
        %v927 = vshrl.u32 %v926, 7
        %v928 = vsub.s32 0, %v927
        %v929 = vrot.slane %v915, %v928
        %v930 = vlaneseq
        %v931 = vshrl.u32 %v930, 7
        %v932 = vsub.s32 0, %v931
        %v933 = vrot.slane %v916, %v932
        %v934 = vlaneseq
        %v935 = vshrl.u32 %v934, 7
        %v936 = vsub.s32 0, %v935
        %v937 = vrot.slane %v917, %v936
        %v943 = vsel %vm614, %v569, 0
        %945 = vmatprep.subr.mxu0 0.0
        %946 = vmatpush1.msra.mxu0 %v898
        %947 = vmatprep.subr.mxu0 0.0
        %948 = vmatpush1.msra.mxu0 %v899
        %949 = vmatprep.subr.mxu0 0.0
        %950 = vmatpush1.msra.mxu0 %v900
        %951 = vmatprep.subr.mxu0 0.0
        %952 = vmatpush1.msra.mxu0 %v901
        %953 = vmatprep.subr.mxu0 0.0
        %954 = vmatpush1.msra.mxu0 0.0
        %955 = vmatprep.subr.mxu0 0.0
        %956 = vmatpush1.msra.mxu0 0.0
        %957 = vmatprep.subr.mxu0 0.0
        %958 = vmatpush1.msra.mxu0 0.0
        %959 = vmatprep.subr.mxu0 0.0
        %960 = vmatpush1.msra.mxu0 0.0
        %961 = vmatprep.subr.mxu0 0.0
        %962 = vmatpush1.msra.mxu0 0.0
        %963 = vmatprep.subr.mxu0 0.0
        %964 = vmatpush1.msra.mxu0 0.0
        %965 = vmatprep.subr.mxu0 0.0
        %966 = vmatpush1.msra.mxu0 0.0
        %967 = vmatprep.subr.mxu0 0.0
        %968 = vmatpush1.msra.mxu0 0.0
        %969 = vmatprep.subr.mxu0 0.0
        %970 = vmatpush1.msra.mxu0 0.0
        %971 = vmatprep.subr.mxu0 0.0
        %972 = vmatpush1.msra.mxu0 0.0
        %973 = vmatprep.subr.mxu0 0.0
        %974 = vmatpush1.msra.mxu0 0.0
        %975 = vmatprep.subr.mxu0 0.0
        %976 = vmatpush1.msra.mxu0 0.0
        %977 = vmatprep.subr.mxu0 0.0
        %978 = vmatpush1.msra.mxu0 0.0
        %979 = vmatprep.subr.mxu0 0.0
        %980 = vmatpush1.msra.mxu0 0.0
        %981 = vmatprep.subr.mxu0 0.0
        %982 = vmatpush1.msra.mxu0 0.0
        %983 = vmatprep.subr.mxu0 0.0
        %984 = vmatpush1.msra.mxu0 0.0
        %985 = vmatprep.subr.mxu0 0.0
        %986 = vmatpush1.msra.mxu0 0.0
        %987 = vmatprep.subr.mxu0 0.0
        %988 = vmatpush1.msra.mxu0 0.0
        %989 = vmatprep.subr.mxu0 0.0
        %990 = vmatpush1.msra.mxu0 0.0
        %991 = vmatprep.subr.mxu0 0.0
        %992 = vmatpush1.msra.mxu0 0.0
        %993 = vmatprep.subr.mxu0 0.0
        %994 = vmatpush1.msra.mxu0 0.0
        %995 = vmatprep.subr.mxu0 0.0
        %996 = vmatpush1.msra.mxu0 0.0
        %997 = vmatprep.subr.mxu0 0.0
        %998 = vmatpush1.msra.mxu0 0.0
        %999 = vmatprep.subr.mxu0 0.0
        %1000 = vmatpush1.msra.mxu0 0.0
        %1001 = vmatprep.subr.mxu0 0.0
        %1002 = vmatpush1.msra.mxu0 0.0
        %1003 = vmatprep.subr.mxu0 0.0
        %1004 = vmatpush1.msra.mxu0 0.0
        %1005 = vmatprep.subr.mxu0 0.0
        %1006 = vmatpush1.msra.mxu0 0.0
        %1007 = vmatprep.subr.mxu0 0.0
        %1008 = vmatpush1.msra.mxu0 0.0
        %1009 = vmatprep.mubr.f32.mxu0 0.0
        %1010 = vmatmul.mubr.f32.gmra.mrb[0].mxu0 %v943
        %v1011 = vpop.f32.mrb[0].mxu0
        %v1012 = vadd.f32 %v925, %v1011
        %v1013 = vpop.f32.mrb[0].mxu0
        %1014 = vdwg.mxu0
        %1015 = vmatprep.subr.mxu0 0.0
        %1016 = vmatpush1.msra.mxu0 %v902
        %1017 = vmatprep.subr.mxu0 0.0
        %1018 = vmatpush1.msra.mxu0 %v903
        %1019 = vmatprep.subr.mxu0 0.0
        %1020 = vmatpush1.msra.mxu0 %v904
        %1021 = vmatprep.subr.mxu0 0.0
        %1022 = vmatpush1.msra.mxu0 %v905
        %1023 = vmatprep.subr.mxu0 0.0
        %1024 = vmatpush1.msra.mxu0 0.0
        %1025 = vmatprep.subr.mxu0 0.0
        %1026 = vmatpush1.msra.mxu0 0.0
        %1027 = vmatprep.subr.mxu0 0.0
        %1028 = vmatpush1.msra.mxu0 0.0
        %1029 = vmatprep.subr.mxu0 0.0
        %1030 = vmatpush1.msra.mxu0 0.0
        %1031 = vmatprep.subr.mxu0 0.0
        %1032 = vmatpush1.msra.mxu0 0.0
        %1033 = vmatprep.subr.mxu0 0.0
        %1034 = vmatpush1.msra.mxu0 0.0
        %1035 = vmatprep.subr.mxu0 0.0
        %1036 = vmatpush1.msra.mxu0 0.0
        %1037 = vmatprep.subr.mxu0 0.0
        %1038 = vmatpush1.msra.mxu0 0.0
        %1039 = vmatprep.subr.mxu0 0.0
        %1040 = vmatpush1.msra.mxu0 0.0
        %1041 = vmatprep.subr.mxu0 0.0
        %1042 = vmatpush1.msra.mxu0 0.0
        %1043 = vmatprep.subr.mxu0 0.0
        %1044 = vmatpush1.msra.mxu0 0.0
        %1045 = vmatprep.subr.mxu0 0.0
        %1046 = vmatpush1.msra.mxu0 0.0
        %1047 = vmatprep.subr.mxu0 0.0
        %1048 = vmatpush1.msra.mxu0 0.0
        %1049 = vmatprep.subr.mxu0 0.0
        %1050 = vmatpush1.msra.mxu0 0.0
        %1051 = vmatprep.subr.mxu0 0.0
        %1052 = vmatpush1.msra.mxu0 0.0
        %1053 = vmatprep.subr.mxu0 0.0
        %1054 = vmatpush1.msra.mxu0 0.0
        %1055 = vmatprep.subr.mxu0 0.0
        %1056 = vmatpush1.msra.mxu0 0.0
        %1057 = vmatprep.subr.mxu0 0.0
        %1058 = vmatpush1.msra.mxu0 0.0
        %1059 = vmatprep.subr.mxu0 0.0
        %1060 = vmatpush1.msra.mxu0 0.0
        %1061 = vmatprep.subr.mxu0 0.0
        %1062 = vmatpush1.msra.mxu0 0.0
        %1063 = vmatprep.subr.mxu0 0.0
        %1064 = vmatpush1.msra.mxu0 0.0
        %1065 = vmatprep.subr.mxu0 0.0
        %1066 = vmatpush1.msra.mxu0 0.0
        %1067 = vmatprep.subr.mxu0 0.0
        %1068 = vmatpush1.msra.mxu0 0.0
        %1069 = vmatprep.subr.mxu0 0.0
        %1070 = vmatpush1.msra.mxu0 0.0
        %1071 = vmatprep.subr.mxu0 0.0
        %1072 = vmatpush1.msra.mxu0 0.0
        %1073 = vmatprep.subr.mxu0 0.0
        %1074 = vmatpush1.msra.mxu0 0.0
        %1075 = vmatprep.subr.mxu0 0.0
        %1076 = vmatpush1.msra.mxu0 0.0
        %1077 = vmatprep.subr.mxu0 0.0
        %1078 = vmatpush1.msra.mxu0 0.0
        %1079 = vmatprep.mubr.f32.mxu0 0.0
        %1080 = vmatmul.mubr.f32.gmra.mrb[0].mxu0 %v943
        %v1081 = vpop.f32.mrb[0].mxu0
        %v1082 = vadd.f32 %v929, %v1081
        %v1083 = vpop.f32.mrb[0].mxu0
        %1084 = vdwg.mxu0
        %1085 = vmatprep.subr.mxu0 0.0
        %1086 = vmatpush1.msra.mxu0 %v906
        %1087 = vmatprep.subr.mxu0 0.0
        %1088 = vmatpush1.msra.mxu0 %v907
        %1089 = vmatprep.subr.mxu0 0.0
        %1090 = vmatpush1.msra.mxu0 %v908
        %1091 = vmatprep.subr.mxu0 0.0
        %1092 = vmatpush1.msra.mxu0 %v909
        %1093 = vmatprep.subr.mxu0 0.0
        %1094 = vmatpush1.msra.mxu0 0.0
        %1095 = vmatprep.subr.mxu0 0.0
        %1096 = vmatpush1.msra.mxu0 0.0
        %1097 = vmatprep.subr.mxu0 0.0
        %1098 = vmatpush1.msra.mxu0 0.0
        %1099 = vmatprep.subr.mxu0 0.0
        %1100 = vmatpush1.msra.mxu0 0.0
        %1101 = vmatprep.subr.mxu0 0.0
        %1102 = vmatpush1.msra.mxu0 0.0
        %1103 = vmatprep.subr.mxu0 0.0
        %1104 = vmatpush1.msra.mxu0 0.0
        %1105 = vmatprep.subr.mxu0 0.0
        %1106 = vmatpush1.msra.mxu0 0.0
        %1107 = vmatprep.subr.mxu0 0.0
        %1108 = vmatpush1.msra.mxu0 0.0
        %1109 = vmatprep.subr.mxu0 0.0
        %1110 = vmatpush1.msra.mxu0 0.0
        %1111 = vmatprep.subr.mxu0 0.0
        %1112 = vmatpush1.msra.mxu0 0.0
        %1113 = vmatprep.subr.mxu0 0.0
        %1114 = vmatpush1.msra.mxu0 0.0
        %1115 = vmatprep.subr.mxu0 0.0
        %1116 = vmatpush1.msra.mxu0 0.0
        %1117 = vmatprep.subr.mxu0 0.0
        %1118 = vmatpush1.msra.mxu0 0.0
        %1119 = vmatprep.subr.mxu0 0.0
        %1120 = vmatpush1.msra.mxu0 0.0
        %1121 = vmatprep.subr.mxu0 0.0
        %1122 = vmatpush1.msra.mxu0 0.0
        %1123 = vmatprep.subr.mxu0 0.0
        %1124 = vmatpush1.msra.mxu0 0.0
        %1125 = vmatprep.subr.mxu0 0.0
        %1126 = vmatpush1.msra.mxu0 0.0
        %1127 = vmatprep.subr.mxu0 0.0
        %1128 = vmatpush1.msra.mxu0 0.0
        %1129 = vmatprep.subr.mxu0 0.0
        %1130 = vmatpush1.msra.mxu0 0.0
        %1131 = vmatprep.subr.mxu0 0.0
        %1132 = vmatpush1.msra.mxu0 0.0
        %1133 = vmatprep.subr.mxu0 0.0
        %1134 = vmatpush1.msra.mxu0 0.0
        %1135 = vmatprep.subr.mxu0 0.0
        %1136 = vmatpush1.msra.mxu0 0.0
        %1137 = vmatprep.subr.mxu0 0.0
        %1138 = vmatpush1.msra.mxu0 0.0
        %1139 = vmatprep.subr.mxu0 0.0
        %1140 = vmatpush1.msra.mxu0 0.0
        %1141 = vmatprep.subr.mxu0 0.0
        %1142 = vmatpush1.msra.mxu0 0.0
        %1143 = vmatprep.subr.mxu0 0.0
        %1144 = vmatpush1.msra.mxu0 0.0
        %1145 = vmatprep.subr.mxu0 0.0
        %1146 = vmatpush1.msra.mxu0 0.0
        %1147 = vmatprep.subr.mxu0 0.0
        %1148 = vmatpush1.msra.mxu0 0.0
        %1149 = vmatprep.mubr.f32.mxu0 0.0
        %1150 = vmatmul.mubr.f32.gmra.mrb[0].mxu0 %v943
        %v1151 = vpop.f32.mrb[0].mxu0
        %v1152 = vadd.f32 %v933, %v1151
        %v1153 = vpop.f32.mrb[0].mxu0
        %1154 = vdwg.mxu0
        %1155 = vmatprep.subr.mxu0 0.0
        %1156 = vmatpush1.msra.mxu0 %v910
        %1157 = vmatprep.subr.mxu0 0.0
        %1158 = vmatpush1.msra.mxu0 %v911
        %1159 = vmatprep.subr.mxu0 0.0
        %1160 = vmatpush1.msra.mxu0 %v912
        %1161 = vmatprep.subr.mxu0 0.0
        %1162 = vmatpush1.msra.mxu0 %v913
        %1163 = vmatprep.subr.mxu0 0.0
        %1164 = vmatpush1.msra.mxu0 0.0
        %1165 = vmatprep.subr.mxu0 0.0
        %1166 = vmatpush1.msra.mxu0 0.0
        %1167 = vmatprep.subr.mxu0 0.0
        %1168 = vmatpush1.msra.mxu0 0.0
        %1169 = vmatprep.subr.mxu0 0.0
        %1170 = vmatpush1.msra.mxu0 0.0
        %1171 = vmatprep.subr.mxu0 0.0
        %1172 = vmatpush1.msra.mxu0 0.0
        %1173 = vmatprep.subr.mxu0 0.0
        %1174 = vmatpush1.msra.mxu0 0.0
        %1175 = vmatprep.subr.mxu0 0.0
        %1176 = vmatpush1.msra.mxu0 0.0
        %1177 = vmatprep.subr.mxu0 0.0
        %1178 = vmatpush1.msra.mxu0 0.0
        %1179 = vmatprep.subr.mxu0 0.0
        %1180 = vmatpush1.msra.mxu0 0.0
        %1181 = vmatprep.subr.mxu0 0.0
        %1182 = vmatpush1.msra.mxu0 0.0
        %1183 = vmatprep.subr.mxu0 0.0
        %1184 = vmatpush1.msra.mxu0 0.0
        %1185 = vmatprep.subr.mxu0 0.0
        %1186 = vmatpush1.msra.mxu0 0.0
        %1187 = vmatprep.subr.mxu0 0.0
        %1188 = vmatpush1.msra.mxu0 0.0
        %1189 = vmatprep.subr.mxu0 0.0
        %1190 = vmatpush1.msra.mxu0 0.0
        %1191 = vmatprep.subr.mxu0 0.0
        %1192 = vmatpush1.msra.mxu0 0.0
        %1193 = vmatprep.subr.mxu0 0.0
        %1194 = vmatpush1.msra.mxu0 0.0
        %1195 = vmatprep.subr.mxu0 0.0
        %1196 = vmatpush1.msra.mxu0 0.0
        %1197 = vmatprep.subr.mxu0 0.0
        %1198 = vmatpush1.msra.mxu0 0.0
        %1199 = vmatprep.subr.mxu0 0.0
        %1200 = vmatpush1.msra.mxu0 0.0
        %1201 = vmatprep.subr.mxu0 0.0
        %1202 = vmatpush1.msra.mxu0 0.0
        %1203 = vmatprep.subr.mxu0 0.0
        %1204 = vmatpush1.msra.mxu0 0.0
        %1205 = vmatprep.subr.mxu0 0.0
        %1206 = vmatpush1.msra.mxu0 0.0
        %1207 = vmatprep.subr.mxu0 0.0
        %1208 = vmatpush1.msra.mxu0 0.0
        %1209 = vmatprep.subr.mxu0 0.0
        %1210 = vmatpush1.msra.mxu0 0.0
        %1211 = vmatprep.subr.mxu0 0.0
        %1212 = vmatpush1.msra.mxu0 0.0
        %1213 = vmatprep.subr.mxu0 0.0
        %1214 = vmatpush1.msra.mxu0 0.0
        %1215 = vmatprep.subr.mxu0 0.0
        %1216 = vmatpush1.msra.mxu0 0.0
        %1217 = vmatprep.subr.mxu0 0.0
        %1218 = vmatpush1.msra.mxu0 0.0
        %1219 = vmatprep.mubr.f32.mxu0 0.0
        %1220 = vmatmul.mubr.f32.gmra.mrb[0].mxu0 %v943
        %v1221 = vpop.f32.mrb[0].mxu0
        %v1222 = vadd.f32 %v937, %v1221
        %v1223 = vpop.f32.mrb[0].mxu0
        %1224 = vdwg.mxu0
        %v1225 = vld [vmem:[%s6] sm:$0xff]
        %v1226 = vld [vmem:[%s6 + $0x8] sm:$0xff]
        %v1227 = vld [vmem:[%s6 + $0x10] sm:$0xff]
        %v1228 = vld [vmem:[%s6 + $0x18] sm:$0xff]
        %v1229 = vld [vmem:[%s6 + $0x20] sm:$0xff]
        %v1230 = vld [vmem:[%s6 + $0x28] sm:$0xff]
        %v1231 = vld [vmem:[%s6 + $0x30] sm:$0xff]
        %v1232 = vld [vmem:[%s6 + $0x38] sm:$0xff]
        %v1233 = vld [vmem:[%s6 + $0x40] sm:$0xff]
        %v1234 = vld [vmem:[%s6 + $0x48] sm:$0xff]
        %v1235 = vld [vmem:[%s6 + $0x50] sm:$0xff]
        %v1236 = vld [vmem:[%s6 + $0x58] sm:$0xff]
        %v1237 = vld [vmem:[%s6 + $0x60] sm:$0xff]
        %v1238 = vld [vmem:[%s6 + $0x68] sm:$0xff]
        %v1239 = vld [vmem:[%s6 + $0x70] sm:$0xff]
        %v1240 = vld [vmem:[%s6 + $0x78] sm:$0xff]
        %v1241 = vld [vmem:[%s9] sm:$0x1]
        %v1242 = vld [vmem:[%s9 + $0x1] sm:$0x1]
        %v1243 = vld [vmem:[%s9 + $0x2] sm:$0x1]
        %v1244 = vld [vmem:[%s9 + $0x3] sm:$0x1]
        %v1249 = vlaneseq
        %v1250 = vshrl.u32 %v1249, 7
        %v1251 = vsub.s32 0, %v1250
        %v1252 = vrot.slane %v1241, %v1251
        %v1253 = vlaneseq
        %v1254 = vshrl.u32 %v1253, 7
        %v1255 = vsub.s32 0, %v1254
        %v1256 = vrot.slane %v1242, %v1255
        %v1257 = vlaneseq
        %v1258 = vshrl.u32 %v1257, 7
        %v1259 = vsub.s32 0, %v1258
        %v1260 = vrot.slane %v1243, %v1259
        %v1261 = vlaneseq
        %v1262 = vshrl.u32 %v1261, 7
        %v1263 = vsub.s32 0, %v1262
        %v1264 = vrot.slane %v1244, %v1263
        %1269 = vmatprep.subr.mxu0 0.0
        %1270 = vmatpush1.msra.mxu0 %v1225
        %1271 = vmatprep.subr.mxu0 0.0
        %1272 = vmatpush1.msra.mxu0 %v1226
        %1273 = vmatprep.subr.mxu0 0.0
        %1274 = vmatpush1.msra.mxu0 %v1227
        %1275 = vmatprep.subr.mxu0 0.0
        %1276 = vmatpush1.msra.mxu0 %v1228
        %1277 = vmatprep.subr.mxu0 0.0
        %1278 = vmatpush1.msra.mxu0 0.0
        %1279 = vmatprep.subr.mxu0 0.0
        %1280 = vmatpush1.msra.mxu0 0.0
        %1281 = vmatprep.subr.mxu0 0.0
        %1282 = vmatpush1.msra.mxu0 0.0
        %1283 = vmatprep.subr.mxu0 0.0
        %1284 = vmatpush1.msra.mxu0 0.0
        %1285 = vmatprep.subr.mxu0 0.0
        %1286 = vmatpush1.msra.mxu0 0.0
        %1287 = vmatprep.subr.mxu0 0.0
        %1288 = vmatpush1.msra.mxu0 0.0
        %1289 = vmatprep.subr.mxu0 0.0
        %1290 = vmatpush1.msra.mxu0 0.0
        %1291 = vmatprep.subr.mxu0 0.0
        %1292 = vmatpush1.msra.mxu0 0.0
        %1293 = vmatprep.subr.mxu0 0.0
        %1294 = vmatpush1.msra.mxu0 0.0
        %1295 = vmatprep.subr.mxu0 0.0
        %1296 = vmatpush1.msra.mxu0 0.0
        %1297 = vmatprep.subr.mxu0 0.0
        %1298 = vmatpush1.msra.mxu0 0.0
        %1299 = vmatprep.subr.mxu0 0.0
        %1300 = vmatpush1.msra.mxu0 0.0
        %1301 = vmatprep.subr.mxu0 0.0
        %1302 = vmatpush1.msra.mxu0 0.0
        %1303 = vmatprep.subr.mxu0 0.0
        %1304 = vmatpush1.msra.mxu0 0.0
        %1305 = vmatprep.subr.mxu0 0.0
        %1306 = vmatpush1.msra.mxu0 0.0
        %1307 = vmatprep.subr.mxu0 0.0
        %1308 = vmatpush1.msra.mxu0 0.0
        %1309 = vmatprep.subr.mxu0 0.0
        %1310 = vmatpush1.msra.mxu0 0.0
        %1311 = vmatprep.subr.mxu0 0.0
        %1312 = vmatpush1.msra.mxu0 0.0
        %1313 = vmatprep.subr.mxu0 0.0
        %1314 = vmatpush1.msra.mxu0 0.0
        %1315 = vmatprep.subr.mxu0 0.0
        %1316 = vmatpush1.msra.mxu0 0.0
        %1317 = vmatprep.subr.mxu0 0.0
        %1318 = vmatpush1.msra.mxu0 0.0
        %1319 = vmatprep.subr.mxu0 0.0
        %1320 = vmatpush1.msra.mxu0 0.0
        %1321 = vmatprep.subr.mxu0 0.0
        %1322 = vmatpush1.msra.mxu0 0.0
        %1323 = vmatprep.subr.mxu0 0.0
        %1324 = vmatpush1.msra.mxu0 0.0
        %1325 = vmatprep.subr.mxu0 0.0
        %1326 = vmatpush1.msra.mxu0 0.0
        %1327 = vmatprep.subr.mxu0 0.0
        %1328 = vmatpush1.msra.mxu0 0.0
        %1329 = vmatprep.subr.mxu0 0.0
        %1330 = vmatpush1.msra.mxu0 0.0
        %1331 = vmatprep.subr.mxu0 0.0
        %1332 = vmatpush1.msra.mxu0 0.0
        %1333 = vmatprep.mubr.f32.mxu0 0.0
        %1334 = vmatmul.mubr.f32.gmra.mrb[0].mxu0 %v943
        %v1335 = vpop.f32.mrb[0].mxu0
        %v1336 = vadd.f32 %v1252, %v1335
        %v1337 = vpop.f32.mrb[0].mxu0
        %1338 = vdwg.mxu0
        %1339 = vmatprep.subr.mxu0 0.0
        %1340 = vmatpush1.msra.mxu0 %v1229
        %1341 = vmatprep.subr.mxu0 0.0
        %1342 = vmatpush1.msra.mxu0 %v1230
        %1343 = vmatprep.subr.mxu0 0.0
        %1344 = vmatpush1.msra.mxu0 %v1231
        %1345 = vmatprep.subr.mxu0 0.0
        %1346 = vmatpush1.msra.mxu0 %v1232
        %1347 = vmatprep.subr.mxu0 0.0
        %1348 = vmatpush1.msra.mxu0 0.0
        %1349 = vmatprep.subr.mxu0 0.0
        %1350 = vmatpush1.msra.mxu0 0.0
        %1351 = vmatprep.subr.mxu0 0.0
        %1352 = vmatpush1.msra.mxu0 0.0
        %1353 = vmatprep.subr.mxu0 0.0
        %1354 = vmatpush1.msra.mxu0 0.0
        %1355 = vmatprep.subr.mxu0 0.0
        %1356 = vmatpush1.msra.mxu0 0.0
        %1357 = vmatprep.subr.mxu0 0.0
        %1358 = vmatpush1.msra.mxu0 0.0
        %1359 = vmatprep.subr.mxu0 0.0
        %1360 = vmatpush1.msra.mxu0 0.0
        %1361 = vmatprep.subr.mxu0 0.0
        %1362 = vmatpush1.msra.mxu0 0.0
        %1363 = vmatprep.subr.mxu0 0.0
        %1364 = vmatpush1.msra.mxu0 0.0
        %1365 = vmatprep.subr.mxu0 0.0
        %1366 = vmatpush1.msra.mxu0 0.0
        %1367 = vmatprep.subr.mxu0 0.0
        %1368 = vmatpush1.msra.mxu0 0.0
        %1369 = vmatprep.subr.mxu0 0.0
        %1370 = vmatpush1.msra.mxu0 0.0
        %1371 = vmatprep.subr.mxu0 0.0
        %1372 = vmatpush1.msra.mxu0 0.0
        %1373 = vmatprep.subr.mxu0 0.0
        %1374 = vmatpush1.msra.mxu0 0.0
        %1375 = vmatprep.subr.mxu0 0.0
        %1376 = vmatpush1.msra.mxu0 0.0
        %1377 = vmatprep.subr.mxu0 0.0
        %1378 = vmatpush1.msra.mxu0 0.0
        %1379 = vmatprep.subr.mxu0 0.0
        %1380 = vmatpush1.msra.mxu0 0.0
        %1381 = vmatprep.subr.mxu0 0.0
        %1382 = vmatpush1.msra.mxu0 0.0
        %1383 = vmatprep.subr.mxu0 0.0
        %1384 = vmatpush1.msra.mxu0 0.0
        %1385 = vmatprep.subr.mxu0 0.0
        %1386 = vmatpush1.msra.mxu0 0.0
        %1387 = vmatprep.subr.mxu0 0.0
        %1388 = vmatpush1.msra.mxu0 0.0
        %1389 = vmatprep.subr.mxu0 0.0
        %1390 = vmatpush1.msra.mxu0 0.0
        %1391 = vmatprep.subr.mxu0 0.0
        %1392 = vmatpush1.msra.mxu0 0.0
        %1393 = vmatprep.subr.mxu0 0.0
        %1394 = vmatpush1.msra.mxu0 0.0
        %1395 = vmatprep.subr.mxu0 0.0
        %1396 = vmatpush1.msra.mxu0 0.0
        %1397 = vmatprep.subr.mxu0 0.0
        %1398 = vmatpush1.msra.mxu0 0.0
        %1399 = vmatprep.subr.mxu0 0.0
        %1400 = vmatpush1.msra.mxu0 0.0
        %1401 = vmatprep.subr.mxu0 0.0
        %1402 = vmatpush1.msra.mxu0 0.0
        %1403 = vmatprep.mubr.f32.mxu0 0.0
        %1404 = vmatmul.mubr.f32.gmra.mrb[0].mxu0 %v943
        %v1405 = vpop.f32.mrb[0].mxu0
        %v1406 = vadd.f32 %v1256, %v1405
        %v1407 = vpop.f32.mrb[0].mxu0
        %1408 = vdwg.mxu0
        %1409 = vmatprep.subr.mxu0 0.0
        %1410 = vmatpush1.msra.mxu0 %v1233
        %1411 = vmatprep.subr.mxu0 0.0
        %1412 = vmatpush1.msra.mxu0 %v1234
        %1413 = vmatprep.subr.mxu0 0.0
        %1414 = vmatpush1.msra.mxu0 %v1235
        %1415 = vmatprep.subr.mxu0 0.0
        %1416 = vmatpush1.msra.mxu0 %v1236
        %1417 = vmatprep.subr.mxu0 0.0
        %1418 = vmatpush1.msra.mxu0 0.0
        %1419 = vmatprep.subr.mxu0 0.0
        %1420 = vmatpush1.msra.mxu0 0.0
        %1421 = vmatprep.subr.mxu0 0.0
        %1422 = vmatpush1.msra.mxu0 0.0
        %1423 = vmatprep.subr.mxu0 0.0
        %1424 = vmatpush1.msra.mxu0 0.0
        %1425 = vmatprep.subr.mxu0 0.0
        %1426 = vmatpush1.msra.mxu0 0.0
        %1427 = vmatprep.subr.mxu0 0.0
        %1428 = vmatpush1.msra.mxu0 0.0
        %1429 = vmatprep.subr.mxu0 0.0
        %1430 = vmatpush1.msra.mxu0 0.0
        %1431 = vmatprep.subr.mxu0 0.0
        %1432 = vmatpush1.msra.mxu0 0.0
        %1433 = vmatprep.subr.mxu0 0.0
        %1434 = vmatpush1.msra.mxu0 0.0
        %1435 = vmatprep.subr.mxu0 0.0
        %1436 = vmatpush1.msra.mxu0 0.0
        %1437 = vmatprep.subr.mxu0 0.0
        %1438 = vmatpush1.msra.mxu0 0.0
        %1439 = vmatprep.subr.mxu0 0.0
        %1440 = vmatpush1.msra.mxu0 0.0
        %1441 = vmatprep.subr.mxu0 0.0
        %1442 = vmatpush1.msra.mxu0 0.0
        %1443 = vmatprep.subr.mxu0 0.0
        %1444 = vmatpush1.msra.mxu0 0.0
        %1445 = vmatprep.subr.mxu0 0.0
        %1446 = vmatpush1.msra.mxu0 0.0
        %1447 = vmatprep.subr.mxu0 0.0
        %1448 = vmatpush1.msra.mxu0 0.0
        %1449 = vmatprep.subr.mxu0 0.0
        %1450 = vmatpush1.msra.mxu0 0.0
        %1451 = vmatprep.subr.mxu0 0.0
        %1452 = vmatpush1.msra.mxu0 0.0
        %1453 = vmatprep.subr.mxu0 0.0
        %1454 = vmatpush1.msra.mxu0 0.0
        %1455 = vmatprep.subr.mxu0 0.0
        %1456 = vmatpush1.msra.mxu0 0.0
        %1457 = vmatprep.subr.mxu0 0.0
        %1458 = vmatpush1.msra.mxu0 0.0
        %1459 = vmatprep.subr.mxu0 0.0
        %1460 = vmatpush1.msra.mxu0 0.0
        %1461 = vmatprep.subr.mxu0 0.0
        %1462 = vmatpush1.msra.mxu0 0.0
        %1463 = vmatprep.subr.mxu0 0.0
        %1464 = vmatpush1.msra.mxu0 0.0
        %1465 = vmatprep.subr.mxu0 0.0
        %1466 = vmatpush1.msra.mxu0 0.0
        %1467 = vmatprep.subr.mxu0 0.0
        %1468 = vmatpush1.msra.mxu0 0.0
        %1469 = vmatprep.subr.mxu0 0.0
        %1470 = vmatpush1.msra.mxu0 0.0
        %1471 = vmatprep.subr.mxu0 0.0
        %1472 = vmatpush1.msra.mxu0 0.0
        %1473 = vmatprep.mubr.f32.mxu0 0.0
        %1474 = vmatmul.mubr.f32.gmra.mrb[0].mxu0 %v943
        %v1475 = vpop.f32.mrb[0].mxu0
        %v1476 = vadd.f32 %v1260, %v1475
        %v1477 = vpop.f32.mrb[0].mxu0
        %1478 = vdwg.mxu0
        %1479 = vmatprep.subr.mxu0 0.0
        %1480 = vmatpush1.msra.mxu0 %v1237
        %1481 = vmatprep.subr.mxu0 0.0
        %1482 = vmatpush1.msra.mxu0 %v1238
        %1483 = vmatprep.subr.mxu0 0.0
        %1484 = vmatpush1.msra.mxu0 %v1239
        %1485 = vmatprep.subr.mxu0 0.0
        %1486 = vmatpush1.msra.mxu0 %v1240
        %1487 = vmatprep.subr.mxu0 0.0
        %1488 = vmatpush1.msra.mxu0 0.0
        %1489 = vmatprep.subr.mxu0 0.0
        %1490 = vmatpush1.msra.mxu0 0.0
        %1491 = vmatprep.subr.mxu0 0.0
        %1492 = vmatpush1.msra.mxu0 0.0
        %1493 = vmatprep.subr.mxu0 0.0
        %1494 = vmatpush1.msra.mxu0 0.0
        %1495 = vmatprep.subr.mxu0 0.0
        %1496 = vmatpush1.msra.mxu0 0.0
        %1497 = vmatprep.subr.mxu0 0.0
        %1498 = vmatpush1.msra.mxu0 0.0
        %1499 = vmatprep.subr.mxu0 0.0
        %1500 = vmatpush1.msra.mxu0 0.0
        %1501 = vmatprep.subr.mxu0 0.0
        %1502 = vmatpush1.msra.mxu0 0.0
        %1503 = vmatprep.subr.mxu0 0.0
        %1504 = vmatpush1.msra.mxu0 0.0
        %1505 = vmatprep.subr.mxu0 0.0
        %1506 = vmatpush1.msra.mxu0 0.0
        %1507 = vmatprep.subr.mxu0 0.0
        %1508 = vmatpush1.msra.mxu0 0.0
        %1509 = vmatprep.subr.mxu0 0.0
        %1510 = vmatpush1.msra.mxu0 0.0
        %1511 = vmatprep.subr.mxu0 0.0
        %1512 = vmatpush1.msra.mxu0 0.0
        %1513 = vmatprep.subr.mxu0 0.0
        %1514 = vmatpush1.msra.mxu0 0.0
        %1515 = vmatprep.subr.mxu0 0.0
        %1516 = vmatpush1.msra.mxu0 0.0
        %1517 = vmatprep.subr.mxu0 0.0
        %1518 = vmatpush1.msra.mxu0 0.0
        %1519 = vmatprep.subr.mxu0 0.0
        %1520 = vmatpush1.msra.mxu0 0.0
        %1521 = vmatprep.subr.mxu0 0.0
        %1522 = vmatpush1.msra.mxu0 0.0
        %1523 = vmatprep.subr.mxu0 0.0
        %1524 = vmatpush1.msra.mxu0 0.0
        %1525 = vmatprep.subr.mxu0 0.0
        %1526 = vmatpush1.msra.mxu0 0.0
        %1527 = vmatprep.subr.mxu0 0.0
        %1528 = vmatpush1.msra.mxu0 0.0
        %1529 = vmatprep.subr.mxu0 0.0
        %1530 = vmatpush1.msra.mxu0 0.0
        %1531 = vmatprep.subr.mxu0 0.0
        %1532 = vmatpush1.msra.mxu0 0.0
        %1533 = vmatprep.subr.mxu0 0.0
        %1534 = vmatpush1.msra.mxu0 0.0
        %1535 = vmatprep.subr.mxu0 0.0
        %1536 = vmatpush1.msra.mxu0 0.0
        %1537 = vmatprep.subr.mxu0 0.0
        %1538 = vmatpush1.msra.mxu0 0.0
        %1539 = vmatprep.subr.mxu0 0.0
        %1540 = vmatpush1.msra.mxu0 0.0
        %1541 = vmatprep.subr.mxu0 0.0
        %1542 = vmatpush1.msra.mxu0 0.0
        %1543 = vmatprep.mubr.f32.mxu0 0.0
        %1544 = vmatmul.mubr.f32.gmra.mrb[0].mxu0 %v943
        %v1545 = vpop.f32.mrb[0].mxu0
        %v1546 = vadd.f32 %v1264, %v1545
        %v1547 = vpop.f32.mrb[0].mxu0
        %1548 = vdwg.mxu0
        %v1549 = vld [vmem:[%s563] sm:$0xf]
        %v1550 = vlaneseq
        %v1551 = vshrl.u32 %v1550, 7
        %v1552 = vsub.s32 0, %v1551
        %v1553 = vrot.slane %v1549, %v1552
        %1555 = vbcast.lane.b32.xlu0 %v1553, 256
        %v1556 = vpop.permute.xlu0 %1555
        %v1557 = vlaneseq
        %v1558 = vshrl.u32 %v1557, 7
        %v1559 = vsub.s32 1, %v1558
        %v1560 = vrot.slane %v1549, %v1559
        %1562 = vbcast.lane.b32.xlu0 %v1560, 256
        %v1563 = vpop.permute.xlu0 %1562
        %v1564 = vlaneseq
        %v1565 = vshrl.u32 %v1564, 7
        %v1566 = vsub.s32 2, %v1565
        %v1567 = vrot.slane %v1549, %v1566
        %1569 = vbcast.lane.b32.xlu0 %v1567, 256
        %v1570 = vpop.permute.xlu0 %1569
        %v1571 = vlaneseq
        %v1572 = vshrl.u32 %v1571, 7
        %v1573 = vsub.s32 3, %v1572
        %v1574 = vrot.slane %v1549, %v1573
        %1576 = vbcast.lane.b32.xlu0 %v1574, 256
        %v1577 = vpop.permute.xlu0 %1576
        %v1578 = vld [vmem:[%s567] sm:$0xf]
        %v1581 = vunpack.c.l.s4 1966171168
        %v1582 = vunpack.c.0.s8 %v1581
        %v1583 = vlaneseq
        %v1584 = vshrl.u32 %v1583, 7
        %v1585 = vsub.s32 %v1582, %v1584
        %v1586 = vrot.slane %v1578, %v1585
        %v1587 = vcombine.high %v1586, %v1586
        %v1589 = vunpack.c.l.s4 1966171168
        %v1590 = vunpack.c.0.s8 %v1589
        %v1591 = vlaneseq
        %v1592 = vshrl.u32 %v1591, 7
        %v1593 = vsub.s32 %v1590, %v1592
        %v1594 = vrot.slane %v1586, %v1593
        %v1596 = vunpack.c.l.s4 1966171168
        %v1597 = vunpack.c.0.s8 %v1596
        %v1598 = vlaneseq
        %v1599 = vshrl.u32 %v1598, 7
        %v1600 = vsub.s32 %v1597, %v1599
        %v1601 = vrot.slane %v1587, %v1600
        %v1602 = vcombine.high %v1594, %v1594
        %v1603 = vcombine.high %v1601, %v1601
        %v1604 = vlaneseq
        %v1605 = vshrl.u32 %v1604, 7
        %v1606 = vsub.s32 0, %v1605
        %v1607 = vrot.slane %v1594, %v1606
        %v1608 = vlaneseq
        %v1609 = vshrl.u32 %v1608, 7
        %v1610 = vsub.s32 0, %v1609
        %v1611 = vrot.slane %v1601, %v1610
        %v1612 = vlaneseq
        %v1613 = vshrl.u32 %v1612, 7
        %v1614 = vsub.s32 0, %v1613
        %v1615 = vrot.slane %v1602, %v1614
        %v1616 = vlaneseq
        %v1617 = vshrl.u32 %v1616, 7
        %v1618 = vsub.s32 0, %v1617
        %v1619 = vrot.slane %v1603, %v1618
        %v1624 = vmul.f32 %v1556, %v1607
        %v1625 = vmul.f32 %v1563, %v1611
        %v1626 = vmul.f32 %v1570, %v1615
        %v1627 = vmul.f32 %v1577, %v1619
        %vm1628 = vcmask 64512
        %v1630 = vsel %vm1628, %v685, 0
        %v1633 = vsel %vm1628, %v1012, 0
        %1635 = vmatprep.subr.mxu0 0.0
        %1636 = vmatpush1.xpose.msra.mxu0 %v1633
        %1637 = vmatprep.subr.mxu0 0.0
        %1638 = vmatpush1.xpose.msra.mxu0 0.0
        %1639 = vmatprep.subr.mxu0 0.0
        %1640 = vmatpush1.xpose.msra.mxu0 0.0
        %1641 = vmatprep.subr.mxu0 0.0
        %1642 = vmatpush1.xpose.msra.mxu0 0.0
        %1643 = vmatprep.subr.mxu0 0.0
        %1644 = vmatpush1.xpose.msra.mxu0 0.0
        %1645 = vmatprep.subr.mxu0 0.0
        %1646 = vmatpush1.xpose.msra.mxu0 0.0
        %1647 = vmatprep.subr.mxu0 0.0
        %1648 = vmatpush1.xpose.msra.mxu0 0.0
        %1649 = vmatprep.subr.mxu0 0.0
        %1650 = vmatpush1.xpose.msra.mxu0 0.0
        %1651 = vmatprep.subr.mxu0 0.0
        %1652 = vmatpush1.xpose.msra.mxu0 0.0
        %1653 = vmatprep.subr.mxu0 0.0
        %1654 = vmatpush1.xpose.msra.mxu0 0.0
        %1655 = vmatprep.subr.mxu0 0.0
        %1656 = vmatpush1.xpose.msra.mxu0 0.0
        %1657 = vmatprep.subr.mxu0 0.0
        %1658 = vmatpush1.xpose.msra.mxu0 0.0
        %1659 = vmatprep.subr.mxu0 0.0
        %1660 = vmatpush1.xpose.msra.mxu0 0.0
        %1661 = vmatprep.subr.mxu0 0.0
        %1662 = vmatpush1.xpose.msra.mxu0 0.0
        %1663 = vmatprep.subr.mxu0 0.0
        %1664 = vmatpush1.xpose.msra.mxu0 0.0
        %1665 = vmatprep.subr.mxu0 0.0
        %1666 = vmatpush1.xpose.msra.mxu0 0.0
        %1667 = vmatprep.subr.mxu0 0.0
        %1668 = vmatpush1.xpose.msra.mxu0 0.0
        %1669 = vmatprep.subr.mxu0 0.0
        %1670 = vmatpush1.xpose.msra.mxu0 0.0
        %1671 = vmatprep.subr.mxu0 0.0
        %1672 = vmatpush1.xpose.msra.mxu0 0.0
        %1673 = vmatprep.subr.mxu0 0.0
        %1674 = vmatpush1.xpose.msra.mxu0 0.0
        %1675 = vmatprep.subr.mxu0 0.0
        %1676 = vmatpush1.xpose.msra.mxu0 0.0
        %1677 = vmatprep.subr.mxu0 0.0
        %1678 = vmatpush1.xpose.msra.mxu0 0.0
        %1679 = vmatprep.subr.mxu0 0.0
        %1680 = vmatpush1.xpose.msra.mxu0 0.0
        %1681 = vmatprep.subr.mxu0 0.0
        %1682 = vmatpush1.xpose.msra.mxu0 0.0
        %1683 = vmatprep.subr.mxu0 0.0
        %1684 = vmatpush1.xpose.msra.mxu0 0.0
        %1685 = vmatprep.subr.mxu0 0.0
        %1686 = vmatpush1.xpose.msra.mxu0 0.0
        %1687 = vmatprep.subr.mxu0 0.0
        %1688 = vmatpush1.xpose.msra.mxu0 0.0
        %1689 = vmatprep.subr.mxu0 0.0
        %1690 = vmatpush1.xpose.msra.mxu0 0.0
        %1691 = vmatprep.subr.mxu0 0.0
        %1692 = vmatpush1.xpose.msra.mxu0 0.0
        %1693 = vmatprep.subr.mxu0 0.0
        %1694 = vmatpush1.xpose.msra.mxu0 0.0
        %1695 = vmatprep.subr.mxu0 0.0
        %1696 = vmatpush1.xpose.msra.mxu0 0.0
        %1697 = vmatprep.subr.mxu0 0.0
        %1698 = vmatpush1.xpose.msra.mxu0 0.0
        %1699 = vmatprep.mubr.f32.mxu0 0.0
        %1700 = vmatmul.mubr.f32.gmra.mrb[0].mxu0 %v1630
        %v1701 = vpop.f32.mrb[0].mxu0
        %v1702 = vadd.f32 0.0, %v1701
        %v1703 = vpop.f32.mrb[0].mxu0
        %1704 = vdwg.mxu0
        %v1706 = vsel %vm1628, %v755, 0
        %v1709 = vsel %vm1628, %v1082, 0
        %1711 = vmatprep.subr.mxu0 0.0
        %1712 = vmatpush1.xpose.msra.mxu0 %v1709
        %1713 = vmatprep.subr.mxu0 0.0
        %1714 = vmatpush1.xpose.msra.mxu0 0.0
        %1715 = vmatprep.subr.mxu0 0.0
        %1716 = vmatpush1.xpose.msra.mxu0 0.0
        %1717 = vmatprep.subr.mxu0 0.0
        %1718 = vmatpush1.xpose.msra.mxu0 0.0
        %1719 = vmatprep.subr.mxu0 0.0
        %1720 = vmatpush1.xpose.msra.mxu0 0.0
        %1721 = vmatprep.subr.mxu0 0.0
        %1722 = vmatpush1.xpose.msra.mxu0 0.0
        %1723 = vmatprep.subr.mxu0 0.0
        %1724 = vmatpush1.xpose.msra.mxu0 0.0
        %1725 = vmatprep.subr.mxu0 0.0
        %1726 = vmatpush1.xpose.msra.mxu0 0.0
        %1727 = vmatprep.subr.mxu0 0.0
        %1728 = vmatpush1.xpose.msra.mxu0 0.0
        %1729 = vmatprep.subr.mxu0 0.0
        %1730 = vmatpush1.xpose.msra.mxu0 0.0
        %1731 = vmatprep.subr.mxu0 0.0
        %1732 = vmatpush1.xpose.msra.mxu0 0.0
        %1733 = vmatprep.subr.mxu0 0.0
        %1734 = vmatpush1.xpose.msra.mxu0 0.0
        %1735 = vmatprep.subr.mxu0 0.0
        %1736 = vmatpush1.xpose.msra.mxu0 0.0
        %1737 = vmatprep.subr.mxu0 0.0
        %1738 = vmatpush1.xpose.msra.mxu0 0.0
        %1739 = vmatprep.subr.mxu0 0.0
        %1740 = vmatpush1.xpose.msra.mxu0 0.0
        %1741 = vmatprep.subr.mxu0 0.0
        %1742 = vmatpush1.xpose.msra.mxu0 0.0
        %1743 = vmatprep.subr.mxu0 0.0
        %1744 = vmatpush1.xpose.msra.mxu0 0.0
        %1745 = vmatprep.subr.mxu0 0.0
        %1746 = vmatpush1.xpose.msra.mxu0 0.0
        %1747 = vmatprep.subr.mxu0 0.0
        %1748 = vmatpush1.xpose.msra.mxu0 0.0
        %1749 = vmatprep.subr.mxu0 0.0
        %1750 = vmatpush1.xpose.msra.mxu0 0.0
        %1751 = vmatprep.subr.mxu0 0.0
        %1752 = vmatpush1.xpose.msra.mxu0 0.0
        %1753 = vmatprep.subr.mxu0 0.0
        %1754 = vmatpush1.xpose.msra.mxu0 0.0
        %1755 = vmatprep.subr.mxu0 0.0
        %1756 = vmatpush1.xpose.msra.mxu0 0.0
        %1757 = vmatprep.subr.mxu0 0.0
        %1758 = vmatpush1.xpose.msra.mxu0 0.0
        %1759 = vmatprep.subr.mxu0 0.0
        %1760 = vmatpush1.xpose.msra.mxu0 0.0
        %1761 = vmatprep.subr.mxu0 0.0
        %1762 = vmatpush1.xpose.msra.mxu0 0.0
        %1763 = vmatprep.subr.mxu0 0.0
        %1764 = vmatpush1.xpose.msra.mxu0 0.0
        %1765 = vmatprep.subr.mxu0 0.0
        %1766 = vmatpush1.xpose.msra.mxu0 0.0
        %1767 = vmatprep.subr.mxu0 0.0
        %1768 = vmatpush1.xpose.msra.mxu0 0.0
        %1769 = vmatprep.subr.mxu0 0.0
        %1770 = vmatpush1.xpose.msra.mxu0 0.0
        %1771 = vmatprep.subr.mxu0 0.0
        %1772 = vmatpush1.xpose.msra.mxu0 0.0
        %1773 = vmatprep.subr.mxu0 0.0
        %1774 = vmatpush1.xpose.msra.mxu0 0.0
        %1775 = vmatprep.mubr.f32.mxu0 0.0
        %1776 = vmatmul.mubr.f32.gmra.mrb[0].mxu0 %v1706
        %v1777 = vpop.f32.mrb[0].mxu0
        %v1778 = vadd.f32 0.0, %v1777
        %v1779 = vpop.f32.mrb[0].mxu0
        %1780 = vdwg.mxu0
        %v1782 = vsel %vm1628, %v825, 0
        %v1785 = vsel %vm1628, %v1152, 0
        %1787 = vmatprep.subr.mxu0 0.0
        %1788 = vmatpush1.xpose.msra.mxu0 %v1785
        %1789 = vmatprep.subr.mxu0 0.0
        %1790 = vmatpush1.xpose.msra.mxu0 0.0
        %1791 = vmatprep.subr.mxu0 0.0
        %1792 = vmatpush1.xpose.msra.mxu0 0.0
        %1793 = vmatprep.subr.mxu0 0.0
        %1794 = vmatpush1.xpose.msra.mxu0 0.0
        %1795 = vmatprep.subr.mxu0 0.0
        %1796 = vmatpush1.xpose.msra.mxu0 0.0
        %1797 = vmatprep.subr.mxu0 0.0
        %1798 = vmatpush1.xpose.msra.mxu0 0.0
        %1799 = vmatprep.subr.mxu0 0.0
        %1800 = vmatpush1.xpose.msra.mxu0 0.0
        %1801 = vmatprep.subr.mxu0 0.0
        %1802 = vmatpush1.xpose.msra.mxu0 0.0
        %1803 = vmatprep.subr.mxu0 0.0
        %1804 = vmatpush1.xpose.msra.mxu0 0.0
        %1805 = vmatprep.subr.mxu0 0.0
        %1806 = vmatpush1.xpose.msra.mxu0 0.0
        %1807 = vmatprep.subr.mxu0 0.0
        %1808 = vmatpush1.xpose.msra.mxu0 0.0
        %1809 = vmatprep.subr.mxu0 0.0
        %1810 = vmatpush1.xpose.msra.mxu0 0.0
        %1811 = vmatprep.subr.mxu0 0.0
        %1812 = vmatpush1.xpose.msra.mxu0 0.0
        %1813 = vmatprep.subr.mxu0 0.0
        %1814 = vmatpush1.xpose.msra.mxu0 0.0
        %1815 = vmatprep.subr.mxu0 0.0
        %1816 = vmatpush1.xpose.msra.mxu0 0.0
        %1817 = vmatprep.subr.mxu0 0.0
        %1818 = vmatpush1.xpose.msra.mxu0 0.0
        %1819 = vmatprep.subr.mxu0 0.0
        %1820 = vmatpush1.xpose.msra.mxu0 0.0
        %1821 = vmatprep.subr.mxu0 0.0
        %1822 = vmatpush1.xpose.msra.mxu0 0.0
        %1823 = vmatprep.subr.mxu0 0.0
        %1824 = vmatpush1.xpose.msra.mxu0 0.0
        %1825 = vmatprep.subr.mxu0 0.0
        %1826 = vmatpush1.xpose.msra.mxu0 0.0
        %1827 = vmatprep.subr.mxu0 0.0
        %1828 = vmatpush1.xpose.msra.mxu0 0.0
        %1829 = vmatprep.subr.mxu0 0.0
        %1830 = vmatpush1.xpose.msra.mxu0 0.0
        %1831 = vmatprep.subr.mxu0 0.0
        %1832 = vmatpush1.xpose.msra.mxu0 0.0
        %1833 = vmatprep.subr.mxu0 0.0
        %1834 = vmatpush1.xpose.msra.mxu0 0.0
        %1835 = vmatprep.subr.mxu0 0.0
        %1836 = vmatpush1.xpose.msra.mxu0 0.0
        %1837 = vmatprep.subr.mxu0 0.0
        %1838 = vmatpush1.xpose.msra.mxu0 0.0
        %1839 = vmatprep.subr.mxu0 0.0
        %1840 = vmatpush1.xpose.msra.mxu0 0.0
        %1841 = vmatprep.subr.mxu0 0.0
        %1842 = vmatpush1.xpose.msra.mxu0 0.0
        %1843 = vmatprep.subr.mxu0 0.0
        %1844 = vmatpush1.xpose.msra.mxu0 0.0
        %1845 = vmatprep.subr.mxu0 0.0
        %1846 = vmatpush1.xpose.msra.mxu0 0.0
        %1847 = vmatprep.subr.mxu0 0.0
        %1848 = vmatpush1.xpose.msra.mxu0 0.0
        %1849 = vmatprep.subr.mxu0 0.0
        %1850 = vmatpush1.xpose.msra.mxu0 0.0
        %1851 = vmatprep.mubr.f32.mxu0 0.0
        %1852 = vmatmul.mubr.f32.gmra.mrb[0].mxu0 %v1782
        %v1853 = vpop.f32.mrb[0].mxu0
        %v1854 = vadd.f32 0.0, %v1853
        %v1855 = vpop.f32.mrb[0].mxu0
        %1856 = vdwg.mxu0
        %v1858 = vsel %vm1628, %v895, 0
        %v1861 = vsel %vm1628, %v1222, 0
        %1863 = vmatprep.subr.mxu0 0.0
        %1864 = vmatpush1.xpose.msra.mxu0 %v1861
        %1865 = vmatprep.subr.mxu0 0.0
        %1866 = vmatpush1.xpose.msra.mxu0 0.0
        %1867 = vmatprep.subr.mxu0 0.0
        %1868 = vmatpush1.xpose.msra.mxu0 0.0
        %1869 = vmatprep.subr.mxu0 0.0
        %1870 = vmatpush1.xpose.msra.mxu0 0.0
        %1871 = vmatprep.subr.mxu0 0.0
        %1872 = vmatpush1.xpose.msra.mxu0 0.0
        %1873 = vmatprep.subr.mxu0 0.0
        %1874 = vmatpush1.xpose.msra.mxu0 0.0
        %1875 = vmatprep.subr.mxu0 0.0
        %1876 = vmatpush1.xpose.msra.mxu0 0.0
        %1877 = vmatprep.subr.mxu0 0.0
        %1878 = vmatpush1.xpose.msra.mxu0 0.0
        %1879 = vmatprep.subr.mxu0 0.0
        %1880 = vmatpush1.xpose.msra.mxu0 0.0
        %1881 = vmatprep.subr.mxu0 0.0
        %1882 = vmatpush1.xpose.msra.mxu0 0.0
        %1883 = vmatprep.subr.mxu0 0.0
        %1884 = vmatpush1.xpose.msra.mxu0 0.0
        %1885 = vmatprep.subr.mxu0 0.0
        %1886 = vmatpush1.xpose.msra.mxu0 0.0
        %1887 = vmatprep.subr.mxu0 0.0
        %1888 = vmatpush1.xpose.msra.mxu0 0.0
        %1889 = vmatprep.subr.mxu0 0.0
        %1890 = vmatpush1.xpose.msra.mxu0 0.0
        %1891 = vmatprep.subr.mxu0 0.0
        %1892 = vmatpush1.xpose.msra.mxu0 0.0
        %1893 = vmatprep.subr.mxu0 0.0
        %1894 = vmatpush1.xpose.msra.mxu0 0.0
        %1895 = vmatprep.subr.mxu0 0.0
        %1896 = vmatpush1.xpose.msra.mxu0 0.0
        %1897 = vmatprep.subr.mxu0 0.0
        %1898 = vmatpush1.xpose.msra.mxu0 0.0
        %1899 = vmatprep.subr.mxu0 0.0
        %1900 = vmatpush1.xpose.msra.mxu0 0.0
        %1901 = vmatprep.subr.mxu0 0.0
        %1902 = vmatpush1.xpose.msra.mxu0 0.0
        %1903 = vmatprep.subr.mxu0 0.0
        %1904 = vmatpush1.xpose.msra.mxu0 0.0
        %1905 = vmatprep.subr.mxu0 0.0
        %1906 = vmatpush1.xpose.msra.mxu0 0.0
        %1907 = vmatprep.subr.mxu0 0.0
        %1908 = vmatpush1.xpose.msra.mxu0 0.0
        %1909 = vmatprep.subr.mxu0 0.0
        %1910 = vmatpush1.xpose.msra.mxu0 0.0
        %1911 = vmatprep.subr.mxu0 0.0
        %1912 = vmatpush1.xpose.msra.mxu0 0.0
        %1913 = vmatprep.subr.mxu0 0.0
        %1914 = vmatpush1.xpose.msra.mxu0 0.0
        %1915 = vmatprep.subr.mxu0 0.0
        %1916 = vmatpush1.xpose.msra.mxu0 0.0
        %1917 = vmatprep.subr.mxu0 0.0
        %1918 = vmatpush1.xpose.msra.mxu0 0.0
        %1919 = vmatprep.subr.mxu0 0.0
        %1920 = vmatpush1.xpose.msra.mxu0 0.0
        %1921 = vmatprep.subr.mxu0 0.0
        %1922 = vmatpush1.xpose.msra.mxu0 0.0
        %1923 = vmatprep.subr.mxu0 0.0
        %1924 = vmatpush1.xpose.msra.mxu0 0.0
        %1925 = vmatprep.subr.mxu0 0.0
        %1926 = vmatpush1.xpose.msra.mxu0 0.0
        %1927 = vmatprep.mubr.f32.mxu0 0.0
        %1928 = vmatmul.mubr.f32.gmra.mrb[0].mxu0 %v1858
        %v1929 = vpop.f32.mrb[0].mxu0
        %v1930 = vadd.f32 0.0, %v1929
        %v1931 = vpop.f32.mrb[0].mxu0
        %1932 = vdwg.mxu0
        %v1933 = vmul.f32 %v1702, 0.35355338
        %v1934 = vmul.f32 %v1778, 0.35355338
        %v1935 = vmul.f32 %v1854, 0.35355338
        %v1936 = vmul.f32 %v1930, 0.35355338
        %v1937 = vadd.f32 %v1933, %v1624
        %v1938 = vadd.f32 %v1934, %v1625
        %v1939 = vadd.f32 %v1935, %v1626
        %v1940 = vadd.f32 %v1936, %v1627
        %v1941 = vsel %vm1628, %v1937, -inf
        %1942 = vmax.xlane.f32.xlu0 %v1941
        %v1943 = vpop.xlane.xlu0 %1942
        %v1944 = vsel %vm1628, %v1938, -inf
        %1945 = vmax.xlane.f32.xlu0 %v1944
        %v1946 = vpop.xlane.xlu0 %1945
        %v1947 = vsel %vm1628, %v1939, -inf
        %1948 = vmax.xlane.f32.xlu0 %v1947
        %v1949 = vpop.xlane.xlu0 %1948
        %v1950 = vsel %vm1628, %v1940, -inf
        %1951 = vmax.xlane.f32.xlu0 %v1950
        %v1952 = vpop.xlane.xlu0 %1951
        %v1953 = vsub.f32 %v1937, %v1943
        %v1954 = vsub.f32 %v1938, %v1946
        %v1955 = vsub.f32 %v1939, %v1949
        %v1956 = vsub.f32 %v1940, %v1952
        %v1957 = vmul.f32 %v1953, 1.442695
        %v1958 = vpow.pop %v1957
        %v1959 = vmul.f32 %v1954, 1.442695
        %v1960 = vpow.pop %v1959
        %v1961 = vmul.f32 %v1955, 1.442695
        %v1962 = vpow.pop %v1961
        %v1963 = vmul.f32 %v1956, 1.442695
        %v1964 = vpow.pop %v1963
        %v1965 = vsel %vm1628, %v1958, 0.0
        %1966 = vadd.xlane.f32.xlu0 %v1965
        %v1967 = vpop.xlane.xlu0 %1966
        %v1968 = vsel %vm1628, %v1960, 0.0
        %1969 = vadd.xlane.f32.xlu0 %v1968
        %v1970 = vpop.xlane.xlu0 %1969
        %v1971 = vsel %vm1628, %v1962, 0.0
        %1972 = vadd.xlane.f32.xlu0 %v1971
        %v1973 = vpop.xlane.xlu0 %1972
        %v1974 = vsel %vm1628, %v1964, 0.0
        %1975 = vadd.xlane.f32.xlu0 %v1974
        %v1976 = vpop.xlane.xlu0 %1975
        %v1977 = vrcp.pop %v1967
        %v1978 = vrcp.pop %v1970
        %v1979 = vrcp.pop %v1973
        %v1980 = vrcp.pop %v1976
        %v1981 = vmul.f32 %v1958, %v1977
        %v1982 = vmul.f32 %v1960, %v1978
        %v1983 = vmul.f32 %v1962, %v1979
        %v1984 = vmul.f32 %v1964, %v1980
        %v1986 = vsel %vm1628, %v1981, 0
        %1988 = vmatprep.subr.mxu0 0.0
        %1989 = vmatpush1.msra.mxu0 %v1336
        %1990 = vmatprep.subr.mxu0 0.0
        %1991 = vmatpush1.msra.mxu0 0.0
        %1992 = vmatprep.subr.mxu0 0.0
        %1993 = vmatpush1.msra.mxu0 0.0
        %1994 = vmatprep.subr.mxu0 0.0
        %1995 = vmatpush1.msra.mxu0 0.0
        %1996 = vmatprep.subr.mxu0 0.0
        %1997 = vmatpush1.msra.mxu0 0.0
        %1998 = vmatprep.subr.mxu0 0.0
        %1999 = vmatpush1.msra.mxu0 0.0
        %2000 = vmatprep.subr.mxu0 0.0
        %2001 = vmatpush1.msra.mxu0 0.0
        %2002 = vmatprep.subr.mxu0 0.0
        %2003 = vmatpush1.msra.mxu0 0.0
        %2004 = vmatprep.subr.mxu0 0.0
        %2005 = vmatpush1.msra.mxu0 0.0
        %2006 = vmatprep.subr.mxu0 0.0
        %2007 = vmatpush1.msra.mxu0 0.0
        %2008 = vmatprep.subr.mxu0 0.0
        %2009 = vmatpush1.msra.mxu0 0.0
        %2010 = vmatprep.subr.mxu0 0.0
        %2011 = vmatpush1.msra.mxu0 0.0
        %2012 = vmatprep.subr.mxu0 0.0
        %2013 = vmatpush1.msra.mxu0 0.0
        %2014 = vmatprep.subr.mxu0 0.0
        %2015 = vmatpush1.msra.mxu0 0.0
        %2016 = vmatprep.subr.mxu0 0.0
        %2017 = vmatpush1.msra.mxu0 0.0
        %2018 = vmatprep.subr.mxu0 0.0
        %2019 = vmatpush1.msra.mxu0 0.0
        %2020 = vmatprep.subr.mxu0 0.0
        %2021 = vmatpush1.msra.mxu0 0.0
        %2022 = vmatprep.subr.mxu0 0.0
        %2023 = vmatpush1.msra.mxu0 0.0
        %2024 = vmatprep.subr.mxu0 0.0
        %2025 = vmatpush1.msra.mxu0 0.0
        %2026 = vmatprep.subr.mxu0 0.0
        %2027 = vmatpush1.msra.mxu0 0.0
        %2028 = vmatprep.subr.mxu0 0.0
        %2029 = vmatpush1.msra.mxu0 0.0
        %2030 = vmatprep.subr.mxu0 0.0
        %2031 = vmatpush1.msra.mxu0 0.0
        %2032 = vmatprep.subr.mxu0 0.0
        %2033 = vmatpush1.msra.mxu0 0.0
        %2034 = vmatprep.subr.mxu0 0.0
        %2035 = vmatpush1.msra.mxu0 0.0
        %2036 = vmatprep.subr.mxu0 0.0
        %2037 = vmatpush1.msra.mxu0 0.0
        %2038 = vmatprep.subr.mxu0 0.0
        %2039 = vmatpush1.msra.mxu0 0.0
        %2040 = vmatprep.subr.mxu0 0.0
        %2041 = vmatpush1.msra.mxu0 0.0
        %2042 = vmatprep.subr.mxu0 0.0
        %2043 = vmatpush1.msra.mxu0 0.0
        %2044 = vmatprep.subr.mxu0 0.0
        %2045 = vmatpush1.msra.mxu0 0.0
        %2046 = vmatprep.subr.mxu0 0.0
        %2047 = vmatpush1.msra.mxu0 0.0
        %2048 = vmatprep.subr.mxu0 0.0
        %2049 = vmatpush1.msra.mxu0 0.0
        %2050 = vmatprep.subr.mxu0 0.0
        %2051 = vmatpush1.msra.mxu0 0.0
        %2052 = vmatprep.mubr.f32.mxu0 0.0
        %2053 = vmatmul.mubr.f32.gmra.mrb[0].mxu0 %v1986
        %v2054 = vpop.f32.mrb[0].mxu0
        %v2055 = vadd.f32 0.0, %v2054
        %v2056 = vpop.f32.mrb[0].mxu0
        %2057 = vdwg.mxu0
        %v2059 = vsel %vm1628, %v1982, 0
        %2061 = vmatprep.subr.mxu0 0.0
        %2062 = vmatpush1.msra.mxu0 %v1406
        %2063 = vmatprep.subr.mxu0 0.0
        %2064 = vmatpush1.msra.mxu0 0.0
        %2065 = vmatprep.subr.mxu0 0.0
        %2066 = vmatpush1.msra.mxu0 0.0
        %2067 = vmatprep.subr.mxu0 0.0
        %2068 = vmatpush1.msra.mxu0 0.0
        %2069 = vmatprep.subr.mxu0 0.0
        %2070 = vmatpush1.msra.mxu0 0.0
        %2071 = vmatprep.subr.mxu0 0.0
        %2072 = vmatpush1.msra.mxu0 0.0
        %2073 = vmatprep.subr.mxu0 0.0
        %2074 = vmatpush1.msra.mxu0 0.0
        %2075 = vmatprep.subr.mxu0 0.0
        %2076 = vmatpush1.msra.mxu0 0.0
        %2077 = vmatprep.subr.mxu0 0.0
        %2078 = vmatpush1.msra.mxu0 0.0
        %2079 = vmatprep.subr.mxu0 0.0
        %2080 = vmatpush1.msra.mxu0 0.0
        %2081 = vmatprep.subr.mxu0 0.0
        %2082 = vmatpush1.msra.mxu0 0.0
        %2083 = vmatprep.subr.mxu0 0.0
        %2084 = vmatpush1.msra.mxu0 0.0
        %2085 = vmatprep.subr.mxu0 0.0
        %2086 = vmatpush1.msra.mxu0 0.0
        %2087 = vmatprep.subr.mxu0 0.0
        %2088 = vmatpush1.msra.mxu0 0.0
        %2089 = vmatprep.subr.mxu0 0.0
        %2090 = vmatpush1.msra.mxu0 0.0
        %2091 = vmatprep.subr.mxu0 0.0
        %2092 = vmatpush1.msra.mxu0 0.0
        %2093 = vmatprep.subr.mxu0 0.0
        %2094 = vmatpush1.msra.mxu0 0.0
        %2095 = vmatprep.subr.mxu0 0.0
        %2096 = vmatpush1.msra.mxu0 0.0
        %2097 = vmatprep.subr.mxu0 0.0
        %2098 = vmatpush1.msra.mxu0 0.0
        %2099 = vmatprep.subr.mxu0 0.0
        %2100 = vmatpush1.msra.mxu0 0.0
        %2101 = vmatprep.subr.mxu0 0.0
        %2102 = vmatpush1.msra.mxu0 0.0
        %2103 = vmatprep.subr.mxu0 0.0
        %2104 = vmatpush1.msra.mxu0 0.0
        %2105 = vmatprep.subr.mxu0 0.0
        %2106 = vmatpush1.msra.mxu0 0.0
        %2107 = vmatprep.subr.mxu0 0.0
        %2108 = vmatpush1.msra.mxu0 0.0
        %2109 = vmatprep.subr.mxu0 0.0
        %2110 = vmatpush1.msra.mxu0 0.0
        %2111 = vmatprep.subr.mxu0 0.0
        %2112 = vmatpush1.msra.mxu0 0.0
        %2113 = vmatprep.subr.mxu0 0.0
        %2114 = vmatpush1.msra.mxu0 0.0
        %2115 = vmatprep.subr.mxu0 0.0
        %2116 = vmatpush1.msra.mxu0 0.0
        %2117 = vmatprep.subr.mxu0 0.0
        %2118 = vmatpush1.msra.mxu0 0.0
        %2119 = vmatprep.subr.mxu0 0.0
        %2120 = vmatpush1.msra.mxu0 0.0
        %2121 = vmatprep.subr.mxu0 0.0
        %2122 = vmatpush1.msra.mxu0 0.0
        %2123 = vmatprep.subr.mxu0 0.0
        %2124 = vmatpush1.msra.mxu0 0.0
        %2125 = vmatprep.mubr.f32.mxu0 0.0
        %2126 = vmatmul.mubr.f32.gmra.mrb[0].mxu0 %v2059
        %v2127 = vpop.f32.mrb[0].mxu0
        %v2128 = vadd.f32 0.0, %v2127
        %v2129 = vpop.f32.mrb[0].mxu0
        %2130 = vdwg.mxu0
        %v2132 = vsel %vm1628, %v1983, 0
        %2134 = vmatprep.subr.mxu0 0.0
        %2135 = vmatpush1.msra.mxu0 %v1476
        %2136 = vmatprep.subr.mxu0 0.0
        %2137 = vmatpush1.msra.mxu0 0.0
        %2138 = vmatprep.subr.mxu0 0.0
        %2139 = vmatpush1.msra.mxu0 0.0
        %2140 = vmatprep.subr.mxu0 0.0
        %2141 = vmatpush1.msra.mxu0 0.0
        %2142 = vmatprep.subr.mxu0 0.0
        %2143 = vmatpush1.msra.mxu0 0.0
        %2144 = vmatprep.subr.mxu0 0.0
        %2145 = vmatpush1.msra.mxu0 0.0
        %2146 = vmatprep.subr.mxu0 0.0
        %2147 = vmatpush1.msra.mxu0 0.0
        %2148 = vmatprep.subr.mxu0 0.0
        %2149 = vmatpush1.msra.mxu0 0.0
        %2150 = vmatprep.subr.mxu0 0.0
        %2151 = vmatpush1.msra.mxu0 0.0
        %2152 = vmatprep.subr.mxu0 0.0
        %2153 = vmatpush1.msra.mxu0 0.0
        %2154 = vmatprep.subr.mxu0 0.0
        %2155 = vmatpush1.msra.mxu0 0.0
        %2156 = vmatprep.subr.mxu0 0.0
        %2157 = vmatpush1.msra.mxu0 0.0
        %2158 = vmatprep.subr.mxu0 0.0
        %2159 = vmatpush1.msra.mxu0 0.0
        %2160 = vmatprep.subr.mxu0 0.0
        %2161 = vmatpush1.msra.mxu0 0.0
        %2162 = vmatprep.subr.mxu0 0.0
        %2163 = vmatpush1.msra.mxu0 0.0
        %2164 = vmatprep.subr.mxu0 0.0
        %2165 = vmatpush1.msra.mxu0 0.0
        %2166 = vmatprep.subr.mxu0 0.0
        %2167 = vmatpush1.msra.mxu0 0.0
        %2168 = vmatprep.subr.mxu0 0.0
        %2169 = vmatpush1.msra.mxu0 0.0
        %2170 = vmatprep.subr.mxu0 0.0
        %2171 = vmatpush1.msra.mxu0 0.0
        %2172 = vmatprep.subr.mxu0 0.0
        %2173 = vmatpush1.msra.mxu0 0.0
        %2174 = vmatprep.subr.mxu0 0.0
        %2175 = vmatpush1.msra.mxu0 0.0
        %2176 = vmatprep.subr.mxu0 0.0
        %2177 = vmatpush1.msra.mxu0 0.0
        %2178 = vmatprep.subr.mxu0 0.0
        %2179 = vmatpush1.msra.mxu0 0.0
        %2180 = vmatprep.subr.mxu0 0.0
        %2181 = vmatpush1.msra.mxu0 0.0
        %2182 = vmatprep.subr.mxu0 0.0
        %2183 = vmatpush1.msra.mxu0 0.0
        %2184 = vmatprep.subr.mxu0 0.0
        %2185 = vmatpush1.msra.mxu0 0.0
        %2186 = vmatprep.subr.mxu0 0.0
        %2187 = vmatpush1.msra.mxu0 0.0
        %2188 = vmatprep.subr.mxu0 0.0
        %2189 = vmatpush1.msra.mxu0 0.0
        %2190 = vmatprep.subr.mxu0 0.0
        %2191 = vmatpush1.msra.mxu0 0.0
        %2192 = vmatprep.subr.mxu0 0.0
        %2193 = vmatpush1.msra.mxu0 0.0
        %2194 = vmatprep.subr.mxu0 0.0
        %2195 = vmatpush1.msra.mxu0 0.0
        %2196 = vmatprep.subr.mxu0 0.0
        %2197 = vmatpush1.msra.mxu0 0.0
        %2198 = vmatprep.mubr.f32.mxu0 0.0
        %2199 = vmatmul.mubr.f32.gmra.mrb[0].mxu0 %v2132
        %v2200 = vpop.f32.mrb[0].mxu0
        %v2201 = vadd.f32 0.0, %v2200
        %v2202 = vpop.f32.mrb[0].mxu0
        %2203 = vdwg.mxu0
        %v2205 = vsel %vm1628, %v1984, 0
        %2207 = vmatprep.subr.mxu0 0.0
        %2208 = vmatpush1.msra.mxu0 %v1546
        %2209 = vmatprep.subr.mxu0 0.0
        %2210 = vmatpush1.msra.mxu0 0.0
        %2211 = vmatprep.subr.mxu0 0.0
        %2212 = vmatpush1.msra.mxu0 0.0
        %2213 = vmatprep.subr.mxu0 0.0
        %2214 = vmatpush1.msra.mxu0 0.0
        %2215 = vmatprep.subr.mxu0 0.0
        %2216 = vmatpush1.msra.mxu0 0.0
        %2217 = vmatprep.subr.mxu0 0.0
        %2218 = vmatpush1.msra.mxu0 0.0
        %2219 = vmatprep.subr.mxu0 0.0
        %2220 = vmatpush1.msra.mxu0 0.0
        %2221 = vmatprep.subr.mxu0 0.0
        %2222 = vmatpush1.msra.mxu0 0.0
        %2223 = vmatprep.subr.mxu0 0.0
        %2224 = vmatpush1.msra.mxu0 0.0
        %2225 = vmatprep.subr.mxu0 0.0
        %2226 = vmatpush1.msra.mxu0 0.0
        %2227 = vmatprep.subr.mxu0 0.0
        %2228 = vmatpush1.msra.mxu0 0.0
        %2229 = vmatprep.subr.mxu0 0.0
        %2230 = vmatpush1.msra.mxu0 0.0
        %2231 = vmatprep.subr.mxu0 0.0
        %2232 = vmatpush1.msra.mxu0 0.0
        %2233 = vmatprep.subr.mxu0 0.0
        %2234 = vmatpush1.msra.mxu0 0.0
        %2235 = vmatprep.subr.mxu0 0.0
        %2236 = vmatpush1.msra.mxu0 0.0
        %2237 = vmatprep.subr.mxu0 0.0
        %2238 = vmatpush1.msra.mxu0 0.0
        %2239 = vmatprep.subr.mxu0 0.0
        %2240 = vmatpush1.msra.mxu0 0.0
        %2241 = vmatprep.subr.mxu0 0.0
        %2242 = vmatpush1.msra.mxu0 0.0
        %2243 = vmatprep.subr.mxu0 0.0
        %2244 = vmatpush1.msra.mxu0 0.0
        %2245 = vmatprep.subr.mxu0 0.0
        %2246 = vmatpush1.msra.mxu0 0.0
        %2247 = vmatprep.subr.mxu0 0.0
        %2248 = vmatpush1.msra.mxu0 0.0
        %2249 = vmatprep.subr.mxu0 0.0
        %2250 = vmatpush1.msra.mxu0 0.0
        %2251 = vmatprep.subr.mxu0 0.0
        %2252 = vmatpush1.msra.mxu0 0.0
        %2253 = vmatprep.subr.mxu0 0.0
        %2254 = vmatpush1.msra.mxu0 0.0
        %2255 = vmatprep.subr.mxu0 0.0
        %2256 = vmatpush1.msra.mxu0 0.0
        %2257 = vmatprep.subr.mxu0 0.0
        %2258 = vmatpush1.msra.mxu0 0.0
        %2259 = vmatprep.subr.mxu0 0.0
        %2260 = vmatpush1.msra.mxu0 0.0
        %2261 = vmatprep.subr.mxu0 0.0
        %2262 = vmatpush1.msra.mxu0 0.0
        %2263 = vmatprep.subr.mxu0 0.0
        %2264 = vmatpush1.msra.mxu0 0.0
        %2265 = vmatprep.subr.mxu0 0.0
        %2266 = vmatpush1.msra.mxu0 0.0
        %2267 = vmatprep.subr.mxu0 0.0
        %2268 = vmatpush1.msra.mxu0 0.0
        %2269 = vmatprep.subr.mxu0 0.0
        %2270 = vmatpush1.msra.mxu0 0.0
        %2271 = vmatprep.mubr.f32.mxu0 0.0
        %2272 = vmatmul.mubr.f32.gmra.mrb[0].mxu0 %v2205
        %v2273 = vpop.f32.mrb[0].mxu0
        %v2274 = vadd.f32 0.0, %v2273
        %v2275 = vpop.f32.mrb[0].mxu0
        %2276 = vdwg.mxu0
        %v2277 = vld [vmem:[%s10] sm:$0xff]
        %v2278 = vld [vmem:[%s10 + $0x8] sm:$0xff]
        %v2279 = vld [vmem:[%s10 + $0x10] sm:$0xff]
        %v2280 = vld [vmem:[%s10 + $0x18] sm:$0xff]
        %v2282 = vsel %vm1628, %v2055, 0
        %2284 = vmatprep.subr.mxu0 0.0
        %2285 = vmatpush1.msra.mxu0 %v2277
        %2286 = vmatprep.subr.mxu0 0.0
        %2287 = vmatpush1.msra.mxu0 0.0
        %2288 = vmatprep.subr.mxu0 0.0
        %2289 = vmatpush1.msra.mxu0 0.0
        %2290 = vmatprep.subr.mxu0 0.0
        %2291 = vmatpush1.msra.mxu0 0.0
        %2292 = vmatprep.subr.mxu0 0.0
        %2293 = vmatpush1.msra.mxu0 0.0
        %2294 = vmatprep.subr.mxu0 0.0
        %2295 = vmatpush1.msra.mxu0 0.0
        %2296 = vmatprep.subr.mxu0 0.0
        %2297 = vmatpush1.msra.mxu0 0.0
        %2298 = vmatprep.subr.mxu0 0.0
        %2299 = vmatpush1.msra.mxu0 0.0
        %2300 = vmatprep.subr.mxu0 0.0
        %2301 = vmatpush1.msra.mxu0 0.0
        %2302 = vmatprep.subr.mxu0 0.0
        %2303 = vmatpush1.msra.mxu0 0.0
        %2304 = vmatprep.subr.mxu0 0.0
        %2305 = vmatpush1.msra.mxu0 0.0
        %2306 = vmatprep.subr.mxu0 0.0
        %2307 = vmatpush1.msra.mxu0 0.0
        %2308 = vmatprep.subr.mxu0 0.0
        %2309 = vmatpush1.msra.mxu0 0.0
        %2310 = vmatprep.subr.mxu0 0.0
        %2311 = vmatpush1.msra.mxu0 0.0
        %2312 = vmatprep.subr.mxu0 0.0
        %2313 = vmatpush1.msra.mxu0 0.0
        %2314 = vmatprep.subr.mxu0 0.0
        %2315 = vmatpush1.msra.mxu0 0.0
        %2316 = vmatprep.subr.mxu0 0.0
        %2317 = vmatpush1.msra.mxu0 0.0
        %2318 = vmatprep.subr.mxu0 0.0
        %2319 = vmatpush1.msra.mxu0 0.0
        %2320 = vmatprep.subr.mxu0 0.0
        %2321 = vmatpush1.msra.mxu0 0.0
        %2322 = vmatprep.subr.mxu0 0.0
        %2323 = vmatpush1.msra.mxu0 0.0
        %2324 = vmatprep.subr.mxu0 0.0
        %2325 = vmatpush1.msra.mxu0 0.0
        %2326 = vmatprep.subr.mxu0 0.0
        %2327 = vmatpush1.msra.mxu0 0.0
        %2328 = vmatprep.subr.mxu0 0.0
        %2329 = vmatpush1.msra.mxu0 0.0
        %2330 = vmatprep.subr.mxu0 0.0
        %2331 = vmatpush1.msra.mxu0 0.0
        %2332 = vmatprep.subr.mxu0 0.0
        %2333 = vmatpush1.msra.mxu0 0.0
        %2334 = vmatprep.subr.mxu0 0.0
        %2335 = vmatpush1.msra.mxu0 0.0
        %2336 = vmatprep.subr.mxu0 0.0
        %2337 = vmatpush1.msra.mxu0 0.0
        %2338 = vmatprep.subr.mxu0 0.0
        %2339 = vmatpush1.msra.mxu0 0.0
        %2340 = vmatprep.subr.mxu0 0.0
        %2341 = vmatpush1.msra.mxu0 0.0
        %2342 = vmatprep.subr.mxu0 0.0
        %2343 = vmatpush1.msra.mxu0 0.0
        %2344 = vmatprep.subr.mxu0 0.0
        %2345 = vmatpush1.msra.mxu0 0.0
        %2346 = vmatprep.subr.mxu0 0.0
        %2347 = vmatpush1.msra.mxu0 0.0
        %2348 = vmatprep.mubr.f32.mxu0 0.0
        %2349 = vmatmul.mubr.f32.gmra.mrb[0].mxu0 %v2282
        %v2350 = vpop.f32.mrb[0].mxu0
        %v2351 = vadd.f32 0.0, %v2350
        %v2352 = vpop.f32.mrb[0].mxu0
        %2353 = vdwg.mxu0
        %v2355 = vsel %vm1628, %v2128, 0
        %2357 = vmatprep.subr.mxu0 0.0
        %2358 = vmatpush1.msra.mxu0 %v2278
        %2359 = vmatprep.subr.mxu0 0.0
        %2360 = vmatpush1.msra.mxu0 0.0
        %2361 = vmatprep.subr.mxu0 0.0
        %2362 = vmatpush1.msra.mxu0 0.0
        %2363 = vmatprep.subr.mxu0 0.0
        %2364 = vmatpush1.msra.mxu0 0.0
        %2365 = vmatprep.subr.mxu0 0.0
        %2366 = vmatpush1.msra.mxu0 0.0
        %2367 = vmatprep.subr.mxu0 0.0
        %2368 = vmatpush1.msra.mxu0 0.0
        %2369 = vmatprep.subr.mxu0 0.0
        %2370 = vmatpush1.msra.mxu0 0.0
        %2371 = vmatprep.subr.mxu0 0.0
        %2372 = vmatpush1.msra.mxu0 0.0
        %2373 = vmatprep.subr.mxu0 0.0
        %2374 = vmatpush1.msra.mxu0 0.0
        %2375 = vmatprep.subr.mxu0 0.0
        %2376 = vmatpush1.msra.mxu0 0.0
        %2377 = vmatprep.subr.mxu0 0.0
        %2378 = vmatpush1.msra.mxu0 0.0
        %2379 = vmatprep.subr.mxu0 0.0
        %2380 = vmatpush1.msra.mxu0 0.0
        %2381 = vmatprep.subr.mxu0 0.0
        %2382 = vmatpush1.msra.mxu0 0.0
        %2383 = vmatprep.subr.mxu0 0.0
        %2384 = vmatpush1.msra.mxu0 0.0
        %2385 = vmatprep.subr.mxu0 0.0
        %2386 = vmatpush1.msra.mxu0 0.0
        %2387 = vmatprep.subr.mxu0 0.0
        %2388 = vmatpush1.msra.mxu0 0.0
        %2389 = vmatprep.subr.mxu0 0.0
        %2390 = vmatpush1.msra.mxu0 0.0
        %2391 = vmatprep.subr.mxu0 0.0
        %2392 = vmatpush1.msra.mxu0 0.0
        %2393 = vmatprep.subr.mxu0 0.0
        %2394 = vmatpush1.msra.mxu0 0.0
        %2395 = vmatprep.subr.mxu0 0.0
        %2396 = vmatpush1.msra.mxu0 0.0
        %2397 = vmatprep.subr.mxu0 0.0
        %2398 = vmatpush1.msra.mxu0 0.0
        %2399 = vmatprep.subr.mxu0 0.0
        %2400 = vmatpush1.msra.mxu0 0.0
        %2401 = vmatprep.subr.mxu0 0.0
        %2402 = vmatpush1.msra.mxu0 0.0
        %2403 = vmatprep.subr.mxu0 0.0
        %2404 = vmatpush1.msra.mxu0 0.0
        %2405 = vmatprep.subr.mxu0 0.0
        %2406 = vmatpush1.msra.mxu0 0.0
        %2407 = vmatprep.subr.mxu0 0.0
        %2408 = vmatpush1.msra.mxu0 0.0
        %2409 = vmatprep.subr.mxu0 0.0
        %2410 = vmatpush1.msra.mxu0 0.0
        %2411 = vmatprep.subr.mxu0 0.0
        %2412 = vmatpush1.msra.mxu0 0.0
        %2413 = vmatprep.subr.mxu0 0.0
        %2414 = vmatpush1.msra.mxu0 0.0
        %2415 = vmatprep.subr.mxu0 0.0
        %2416 = vmatpush1.msra.mxu0 0.0
        %2417 = vmatprep.subr.mxu0 0.0
        %2418 = vmatpush1.msra.mxu0 0.0
        %2419 = vmatprep.subr.mxu0 0.0
        %2420 = vmatpush1.msra.mxu0 0.0
        %2421 = vmatprep.mubr.f32.mxu0 0.0
        %2422 = vmatmul.mubr.f32.gmra.mrb[0].mxu0 %v2355
        %v2423 = vpop.f32.mrb[0].mxu0
        %v2424 = vadd.f32 0.0, %v2423
        %v2425 = vpop.f32.mrb[0].mxu0
        %2426 = vdwg.mxu0
        %v2428 = vsel %vm1628, %v2201, 0
        %2430 = vmatprep.subr.mxu0 0.0
        %2431 = vmatpush1.msra.mxu0 %v2279
        %2432 = vmatprep.subr.mxu0 0.0
        %2433 = vmatpush1.msra.mxu0 0.0
        %2434 = vmatprep.subr.mxu0 0.0
        %2435 = vmatpush1.msra.mxu0 0.0
        %2436 = vmatprep.subr.mxu0 0.0
        %2437 = vmatpush1.msra.mxu0 0.0
        %2438 = vmatprep.subr.mxu0 0.0
        %2439 = vmatpush1.msra.mxu0 0.0
        %2440 = vmatprep.subr.mxu0 0.0
        %2441 = vmatpush1.msra.mxu0 0.0
        %2442 = vmatprep.subr.mxu0 0.0
        %2443 = vmatpush1.msra.mxu0 0.0
        %2444 = vmatprep.subr.mxu0 0.0
        %2445 = vmatpush1.msra.mxu0 0.0
        %2446 = vmatprep.subr.mxu0 0.0
        %2447 = vmatpush1.msra.mxu0 0.0
        %2448 = vmatprep.subr.mxu0 0.0
        %2449 = vmatpush1.msra.mxu0 0.0
        %2450 = vmatprep.subr.mxu0 0.0
        %2451 = vmatpush1.msra.mxu0 0.0
        %2452 = vmatprep.subr.mxu0 0.0
        %2453 = vmatpush1.msra.mxu0 0.0
        %2454 = vmatprep.subr.mxu0 0.0
        %2455 = vmatpush1.msra.mxu0 0.0
        %2456 = vmatprep.subr.mxu0 0.0
        %2457 = vmatpush1.msra.mxu0 0.0
        %2458 = vmatprep.subr.mxu0 0.0
        %2459 = vmatpush1.msra.mxu0 0.0
        %2460 = vmatprep.subr.mxu0 0.0
        %2461 = vmatpush1.msra.mxu0 0.0
        %2462 = vmatprep.subr.mxu0 0.0
        %2463 = vmatpush1.msra.mxu0 0.0
        %2464 = vmatprep.subr.mxu0 0.0
        %2465 = vmatpush1.msra.mxu0 0.0
        %2466 = vmatprep.subr.mxu0 0.0
        %2467 = vmatpush1.msra.mxu0 0.0
        %2468 = vmatprep.subr.mxu0 0.0
        %2469 = vmatpush1.msra.mxu0 0.0
        %2470 = vmatprep.subr.mxu0 0.0
        %2471 = vmatpush1.msra.mxu0 0.0
        %2472 = vmatprep.subr.mxu0 0.0
        %2473 = vmatpush1.msra.mxu0 0.0
        %2474 = vmatprep.subr.mxu0 0.0
        %2475 = vmatpush1.msra.mxu0 0.0
        %2476 = vmatprep.subr.mxu0 0.0
        %2477 = vmatpush1.msra.mxu0 0.0
        %2478 = vmatprep.subr.mxu0 0.0
        %2479 = vmatpush1.msra.mxu0 0.0
        %2480 = vmatprep.subr.mxu0 0.0
        %2481 = vmatpush1.msra.mxu0 0.0
        %2482 = vmatprep.subr.mxu0 0.0
        %2483 = vmatpush1.msra.mxu0 0.0
        %2484 = vmatprep.subr.mxu0 0.0
        %2485 = vmatpush1.msra.mxu0 0.0
        %2486 = vmatprep.subr.mxu0 0.0
        %2487 = vmatpush1.msra.mxu0 0.0
        %2488 = vmatprep.subr.mxu0 0.0
        %2489 = vmatpush1.msra.mxu0 0.0
        %2490 = vmatprep.subr.mxu0 0.0
        %2491 = vmatpush1.msra.mxu0 0.0
        %2492 = vmatprep.subr.mxu0 0.0
        %2493 = vmatpush1.msra.mxu0 0.0
        %2494 = vmatprep.mubr.f32.mxu0 0.0
        %2495 = vmatmul.mubr.f32.gmra.mrb[0].mxu0 %v2428
        %v2496 = vpop.f32.mrb[0].mxu0
        %v2497 = vadd.f32 0.0, %v2496
        %v2498 = vpop.f32.mrb[0].mxu0
        %2499 = vdwg.mxu0
        %v2501 = vsel %vm1628, %v2274, 0
        %2503 = vmatprep.subr.mxu0 0.0
        %2504 = vmatpush1.msra.mxu0 %v2280
        %2505 = vmatprep.subr.mxu0 0.0
        %2506 = vmatpush1.msra.mxu0 0.0
        %2507 = vmatprep.subr.mxu0 0.0
        %2508 = vmatpush1.msra.mxu0 0.0
        %2509 = vmatprep.subr.mxu0 0.0
        %2510 = vmatpush1.msra.mxu0 0.0
        %2511 = vmatprep.subr.mxu0 0.0
        %2512 = vmatpush1.msra.mxu0 0.0
        %2513 = vmatprep.subr.mxu0 0.0
        %2514 = vmatpush1.msra.mxu0 0.0
        %2515 = vmatprep.subr.mxu0 0.0
        %2516 = vmatpush1.msra.mxu0 0.0
        %2517 = vmatprep.subr.mxu0 0.0
        %2518 = vmatpush1.msra.mxu0 0.0
        %2519 = vmatprep.subr.mxu0 0.0
        %2520 = vmatpush1.msra.mxu0 0.0
        %2521 = vmatprep.subr.mxu0 0.0
        %2522 = vmatpush1.msra.mxu0 0.0
        %2523 = vmatprep.subr.mxu0 0.0
        %2524 = vmatpush1.msra.mxu0 0.0
        %2525 = vmatprep.subr.mxu0 0.0
        %2526 = vmatpush1.msra.mxu0 0.0
        %2527 = vmatprep.subr.mxu0 0.0
        %2528 = vmatpush1.msra.mxu0 0.0
        %2529 = vmatprep.subr.mxu0 0.0
        %2530 = vmatpush1.msra.mxu0 0.0
        %2531 = vmatprep.subr.mxu0 0.0
        %2532 = vmatpush1.msra.mxu0 0.0
        %2533 = vmatprep.subr.mxu0 0.0
        %2534 = vmatpush1.msra.mxu0 0.0
        %2535 = vmatprep.subr.mxu0 0.0
        %2536 = vmatpush1.msra.mxu0 0.0
        %2537 = vmatprep.subr.mxu0 0.0
        %2538 = vmatpush1.msra.mxu0 0.0
        %2539 = vmatprep.subr.mxu0 0.0
        %2540 = vmatpush1.msra.mxu0 0.0
        %2541 = vmatprep.subr.mxu0 0.0
        %2542 = vmatpush1.msra.mxu0 0.0
        %2543 = vmatprep.subr.mxu0 0.0
        %2544 = vmatpush1.msra.mxu0 0.0
        %2545 = vmatprep.subr.mxu0 0.0
        %2546 = vmatpush1.msra.mxu0 0.0
        %2547 = vmatprep.subr.mxu0 0.0
        %2548 = vmatpush1.msra.mxu0 0.0
        %2549 = vmatprep.subr.mxu0 0.0
        %2550 = vmatpush1.msra.mxu0 0.0
        %2551 = vmatprep.subr.mxu0 0.0
        %2552 = vmatpush1.msra.mxu0 0.0
        %2553 = vmatprep.subr.mxu0 0.0
        %2554 = vmatpush1.msra.mxu0 0.0
        %2555 = vmatprep.subr.mxu0 0.0
        %2556 = vmatpush1.msra.mxu0 0.0
        %2557 = vmatprep.subr.mxu0 0.0
        %2558 = vmatpush1.msra.mxu0 0.0
        %2559 = vmatprep.subr.mxu0 0.0
        %2560 = vmatpush1.msra.mxu0 0.0
        %2561 = vmatprep.subr.mxu0 0.0
        %2562 = vmatpush1.msra.mxu0 0.0
        %2563 = vmatprep.subr.mxu0 0.0
        %2564 = vmatpush1.msra.mxu0 0.0
        %2565 = vmatprep.subr.mxu0 0.0
        %2566 = vmatpush1.msra.mxu0 0.0
        %2567 = vmatprep.mubr.f32.mxu0 0.0
        %2568 = vmatmul.mubr.f32.gmra.mrb[0].mxu0 %v2501
        %v2569 = vpop.f32.mrb[0].mxu0
        %v2570 = vadd.f32 0.0, %v2569
        %v2571 = vpop.f32.mrb[0].mxu0
        %2572 = vdwg.mxu0
        %v2573 = vsel %vm614, %v2351, 0.0
        %v2574 = vsel %vm614, %v2424, 0.0
        %v2575 = vadd.f32 %v2573, %v2574
        %v2576 = vsel %vm614, %v2497, 0.0
        %v2577 = vadd.f32 %v2575, %v2576
        %v2578 = vsel %vm614, %v2570, 0.0
        %v2579 = vadd.f32 %v2577, %v2578
        %v2580 = vld [vmem:[%s11] sm:$0x1]
        %v2582 = vlaneseq
        %v2583 = vshrl.u32 %v2582, 7
        %v2584 = vsub.s32 0, %v2583
        %v2585 = vrot.slane %v2580, %v2584
        %v2587 = vadd.f32 %v2579, %v2585
        %v2588 = vadd.f32 %v568, %v2587
        %v2589 = vld [vmem:[%s12] sm:$0xff]
        %v2590 = vld [vmem:[%s12 + $0x8] sm:$0xff]
        %v2591 = vld [vmem:[%s12 + $0x10] sm:$0xff]
        %v2592 = vld [vmem:[%s12 + $0x18] sm:$0xff]
        %v2593 = vld [vmem:[%s13] sm:$0x1]
        %v2595 = vlaneseq
        %v2596 = vshrl.u32 %v2595, 7
        %v2597 = vsub.s32 0, %v2596
        %v2598 = vrot.slane %v2593, %v2597
        %v2601 = vsel %vm614, %v2588, 0
        %2603 = vmatprep.subr.mxu0 0.0
        %2604 = vmatpush1.msra.mxu0 %v2589
        %2605 = vmatprep.subr.mxu0 0.0
        %2606 = vmatpush1.msra.mxu0 %v2590
        %2607 = vmatprep.subr.mxu0 0.0
        %2608 = vmatpush1.msra.mxu0 %v2591
        %2609 = vmatprep.subr.mxu0 0.0
        %2610 = vmatpush1.msra.mxu0 %v2592
        %2611 = vmatprep.subr.mxu0 0.0
        %2612 = vmatpush1.msra.mxu0 0.0
        %2613 = vmatprep.subr.mxu0 0.0
        %2614 = vmatpush1.msra.mxu0 0.0
        %2615 = vmatprep.subr.mxu0 0.0
        %2616 = vmatpush1.msra.mxu0 0.0
        %2617 = vmatprep.subr.mxu0 0.0
        %2618 = vmatpush1.msra.mxu0 0.0
        %2619 = vmatprep.subr.mxu0 0.0
        %2620 = vmatpush1.msra.mxu0 0.0
        %2621 = vmatprep.subr.mxu0 0.0
        %2622 = vmatpush1.msra.mxu0 0.0
        %2623 = vmatprep.subr.mxu0 0.0
        %2624 = vmatpush1.msra.mxu0 0.0
        %2625 = vmatprep.subr.mxu0 0.0
        %2626 = vmatpush1.msra.mxu0 0.0
        %2627 = vmatprep.subr.mxu0 0.0
        %2628 = vmatpush1.msra.mxu0 0.0
        %2629 = vmatprep.subr.mxu0 0.0
        %2630 = vmatpush1.msra.mxu0 0.0
        %2631 = vmatprep.subr.mxu0 0.0
        %2632 = vmatpush1.msra.mxu0 0.0
        %2633 = vmatprep.subr.mxu0 0.0
        %2634 = vmatpush1.msra.mxu0 0.0
        %2635 = vmatprep.subr.mxu0 0.0
        %2636 = vmatpush1.msra.mxu0 0.0
        %2637 = vmatprep.subr.mxu0 0.0
        %2638 = vmatpush1.msra.mxu0 0.0
        %2639 = vmatprep.subr.mxu0 0.0
        %2640 = vmatpush1.msra.mxu0 0.0
        %2641 = vmatprep.subr.mxu0 0.0
        %2642 = vmatpush1.msra.mxu0 0.0
        %2643 = vmatprep.subr.mxu0 0.0
        %2644 = vmatpush1.msra.mxu0 0.0
        %2645 = vmatprep.subr.mxu0 0.0
        %2646 = vmatpush1.msra.mxu0 0.0
        %2647 = vmatprep.subr.mxu0 0.0
        %2648 = vmatpush1.msra.mxu0 0.0
        %2649 = vmatprep.subr.mxu0 0.0
        %2650 = vmatpush1.msra.mxu0 0.0
        %2651 = vmatprep.subr.mxu0 0.0
        %2652 = vmatpush1.msra.mxu0 0.0
        %2653 = vmatprep.subr.mxu0 0.0
        %2654 = vmatpush1.msra.mxu0 0.0
        %2655 = vmatprep.subr.mxu0 0.0
        %2656 = vmatpush1.msra.mxu0 0.0
        %2657 = vmatprep.subr.mxu0 0.0
        %2658 = vmatpush1.msra.mxu0 0.0
        %2659 = vmatprep.subr.mxu0 0.0
        %2660 = vmatpush1.msra.mxu0 0.0
        %2661 = vmatprep.subr.mxu0 0.0
        %2662 = vmatpush1.msra.mxu0 0.0
        %2663 = vmatprep.subr.mxu0 0.0
        %2664 = vmatpush1.msra.mxu0 0.0
        %2665 = vmatprep.subr.mxu0 0.0
        %2666 = vmatpush1.msra.mxu0 0.0
        %2667 = vmatprep.mubr.f32.mxu0 0.0
        %2668 = vmatmul.mubr.f32.gmra.mrb[0].mxu0 %v2601
        %v2669 = vpop.f32.mrb[0].mxu0
        %v2670 = vadd.f32 %v2598, %v2669
        %v2671 = vpop.f32.mrb[0].mxu0
        %2672 = vdwg.mxu0
        %v2673 = vmax.f32 %v2670, 0.0
        %v2674 = vld [vmem:[%s14] sm:$0xff]
        %v2675 = vld [vmem:[%s14 + $0x8] sm:$0xff]
        %v2676 = vld [vmem:[%s14 + $0x10] sm:$0xff]
        %v2677 = vld [vmem:[%s14 + $0x18] sm:$0xff]
        %v2678 = vld [vmem:[%s14 + $0x20] sm:$0xff]
        %v2679 = vld [vmem:[%s14 + $0x28] sm:$0xff]
        %v2680 = vld [vmem:[%s14 + $0x30] sm:$0xff]
        %v2681 = vld [vmem:[%s14 + $0x38] sm:$0xff]
        %v2682 = vld [vmem:[%s15] sm:$0x1]
        %v2684 = vlaneseq
        %v2685 = vshrl.u32 %v2684, 7
        %v2686 = vsub.s32 0, %v2685
        %v2687 = vrot.slane %v2682, %v2686
        %vm2689 = vcmask 523264
        %v2691 = vsel %vm2689, %v2673, 0
        %2693 = vmatprep.subr.mxu0 0.0
        %2694 = vmatpush1.msra.mxu0 %v2674
        %2695 = vmatprep.subr.mxu0 0.0
        %2696 = vmatpush1.msra.mxu0 %v2675
        %2697 = vmatprep.subr.mxu0 0.0
        %2698 = vmatpush1.msra.mxu0 %v2676
        %2699 = vmatprep.subr.mxu0 0.0
        %2700 = vmatpush1.msra.mxu0 %v2677
        %2701 = vmatprep.subr.mxu0 0.0
        %2702 = vmatpush1.msra.mxu0 %v2678
        %2703 = vmatprep.subr.mxu0 0.0
        %2704 = vmatpush1.msra.mxu0 %v2679
        %2705 = vmatprep.subr.mxu0 0.0
        %2706 = vmatpush1.msra.mxu0 %v2680
        %2707 = vmatprep.subr.mxu0 0.0
        %2708 = vmatpush1.msra.mxu0 %v2681
        %2709 = vmatprep.subr.mxu0 0.0
        %2710 = vmatpush1.msra.mxu0 0.0
        %2711 = vmatprep.subr.mxu0 0.0
        %2712 = vmatpush1.msra.mxu0 0.0
        %2713 = vmatprep.subr.mxu0 0.0
        %2714 = vmatpush1.msra.mxu0 0.0
        %2715 = vmatprep.subr.mxu0 0.0
        %2716 = vmatpush1.msra.mxu0 0.0
        %2717 = vmatprep.subr.mxu0 0.0
        %2718 = vmatpush1.msra.mxu0 0.0
        %2719 = vmatprep.subr.mxu0 0.0
        %2720 = vmatpush1.msra.mxu0 0.0
        %2721 = vmatprep.subr.mxu0 0.0
        %2722 = vmatpush1.msra.mxu0 0.0
        %2723 = vmatprep.subr.mxu0 0.0
        %2724 = vmatpush1.msra.mxu0 0.0
        %2725 = vmatprep.subr.mxu0 0.0
        %2726 = vmatpush1.msra.mxu0 0.0
        %2727 = vmatprep.subr.mxu0 0.0
        %2728 = vmatpush1.msra.mxu0 0.0
        %2729 = vmatprep.subr.mxu0 0.0
        %2730 = vmatpush1.msra.mxu0 0.0
        %2731 = vmatprep.subr.mxu0 0.0
        %2732 = vmatpush1.msra.mxu0 0.0
        %2733 = vmatprep.subr.mxu0 0.0
        %2734 = vmatpush1.msra.mxu0 0.0
        %2735 = vmatprep.subr.mxu0 0.0
        %2736 = vmatpush1.msra.mxu0 0.0
        %2737 = vmatprep.subr.mxu0 0.0
        %2738 = vmatpush1.msra.mxu0 0.0
        %2739 = vmatprep.subr.mxu0 0.0
        %2740 = vmatpush1.msra.mxu0 0.0
        %2741 = vmatprep.subr.mxu0 0.0
        %2742 = vmatpush1.msra.mxu0 0.0
        %2743 = vmatprep.subr.mxu0 0.0
        %2744 = vmatpush1.msra.mxu0 0.0
        %2745 = vmatprep.subr.mxu0 0.0
        %2746 = vmatpush1.msra.mxu0 0.0
        %2747 = vmatprep.subr.mxu0 0.0
        %2748 = vmatpush1.msra.mxu0 0.0
        %2749 = vmatprep.subr.mxu0 0.0
        %2750 = vmatpush1.msra.mxu0 0.0
        %2751 = vmatprep.subr.mxu0 0.0
        %2752 = vmatpush1.msra.mxu0 0.0
        %2753 = vmatprep.subr.mxu0 0.0
        %2754 = vmatpush1.msra.mxu0 0.0
        %2755 = vmatprep.subr.mxu0 0.0
        %2756 = vmatpush1.msra.mxu0 0.0
        %2757 = vmatprep.mubr.f32.mxu0 0.0
        %2758 = vmatmul.mubr.f32.gmra.mrb[0].mxu0 %v2691
        %v2759 = vpop.f32.mrb[0].mxu0
        %v2760 = vadd.f32 %v2687, %v2759
        %v2761 = vpop.f32.mrb[0].mxu0
        %2762 = vdwg.mxu0
        %v2763 = vadd.f32 %v2588, %v2760
        %2764 = vst.msk [vmem:[%s551] sm:$0xff] %vm614, %v2763
        %s2765 = sand.u32 %s394, 1
        %s2766 = scalar_lea.sflag [#allocation3], %s2765
        %s2767 = sand.u32 %s394, 1
        %s2768 = smul.addr %s2767, 8
        %s2769 = scalar_lea.vmem [#allocation2], %s2768
        // Predicated region
        $region85: #{tpu_custom_call.1} parent=83 // pred_check
          %p2770 = pneg %p404
        $region86: #{tpu_custom_call.1} parent=83 // pred_check_branch
          %2772 = sbr.rel (%p2770) target = $region88
        $region87: #{tpu_custom_call.1} parent=83 // pred_region
          %s2774 = ssub.s32 128, 128
          %2775 = vsyncadd %s2766, %s2774
          %s2776 = smul.addr %s30, 128
          %s2777 = scalar_lea.hbm %s16, %s2776
          %s2779 = sshll.u32 %s2769, 4
          %s2780 = int_to_ptr.vmem [resolvable:$true] %s2779
          %2782 = dma.vmem_to_hbm [thread:$0]  %s2780, 128, %s2777, %s2766
        $region88: #{tpu_custom_call.1} parent=83 // pred_fallthru
          _
      $region84: #{tpu_custom_call.1} parent=5 // pred_fallthru
        _
      %p2783 = scmp.le.s32.totalorder 2, %s25
      // Predicated region
      $region89: #{tpu_custom_call.1} parent=5 // pred_check
        %p2784 = pneg %p2783
      $region90: #{tpu_custom_call.1} parent=5 // pred_check_branch
        %2786 = sbr.rel (%p2784) target = $region92
      $region91: #{tpu_custom_call.1} parent=5 // pred_region
        %s2787 = ssub.s32 %s25, 2
        // Predicated region
        $region93: #{tpu_custom_call.1} parent=91 // pred_check
          %p2788 = pneg %p410
        $region94: #{tpu_custom_call.1} parent=91 // pred_check_branch
          %2790 = sbr.rel (%p2788) target = $region96
        $region95: #{tpu_custom_call.1} parent=91 // pred_region
          %s2791 = sand.u32 %s395, 1
          %s2792 = scalar_lea.sflag [#allocation3], %s2791
          %s2793 = sand.u32 %s395, 1
          %s2794 = smul.addr %s2793, 8
          %s2795 = scalar_lea.vmem [#allocation2], %s2794
          %2796 = dma.done %s2792, 128
        $region96: #{tpu_custom_call.1} parent=91 // pred_fallthru
          _
      $region92: #{tpu_custom_call.1} parent=5 // pred_fallthru
        _
    $region6: #{tpu_custom_call.1} parent=1 // loop_footer
      %s29 = sadd.s32 1, %s25
    $region7: #{tpu_custom_call.1} parent=1 // loop_footer_branch
      %24 = sbr.rel target = $region3
    $region8: #{tpu_custom_call.1} parent=1 // loop_exit
      _
    %2797 = vsyncpa [#allocation3], 1
    %s2798 = scalar_lea.sflag [#allocation3], 1
    %2799 = vsyncpa %s2798, 1

</llo_original>
